<compile_context>
chip_gen: v7x
topology: tpu7x:2x2x1
jax: 0.10.0
libtpu: 0.0.40
codegen_flags: <defaults>
</compile_context>

<pallas_src>
import jax
import jax.numpy as jnp
from jax import lax
from jax.experimental import pallas as pl
from jax.experimental.pallas import tpu as pltpu


def _round_up(x, m):
    return ((x + m - 1) // m) * m


# ---------------------------------------------------------------------------
# Kernel
# ---------------------------------------------------------------------------
def _encoder_kernel(x_ref,
                    w1_ref, b1_ref,
                    w2_ref, b2_ref,
                    w3_ref, b3_ref,
                    wh_ref, bh_ref,
                    out_ref):
    # Hot path: 4 matmuls (3 hidden layers + fused mu/log_sigma head) + 3 ReLUs,
    # fully fused in VMEM.  MXU operands are bf16, accumulation is f32, and the
    # elementwise epilogue (bias add / ReLU) stays f32 (safe on every gen).
    x = x_ref[...].astype(jnp.bfloat16)

    h = jnp.dot(x, w1_ref[...], preferred_element_type=jnp.float32) + b1_ref[...]
    h = jnp.maximum(h, 0.0)

    h = jnp.dot(h.astype(jnp.bfloat16), w2_ref[...],
                preferred_element_type=jnp.float32) + b2_ref[...]
    h = jnp.maximum(h, 0.0)

    h = jnp.dot(h.astype(jnp.bfloat16), w3_ref[...],
                preferred_element_type=jnp.float32) + b3_ref[...]
    h = jnp.maximum(h, 0.0)

    out = jnp.dot(h.astype(jnp.bfloat16), wh_ref[...],
                  preferred_element_type=jnp.float32) + bh_ref[...]
    out_ref[...] = out.astype(out_ref.dtype)


# ---------------------------------------------------------------------------
# One-time weight packing (do this once, outside the per-call path)
# ---------------------------------------------------------------------------
def prepare_encoder_params(params, *, feature_align=128):
    """Pad weights/biases to lane-dense widths and cast weights to bf16, once.

    params: dict of (w, b) per layer, w as [in_features, out_features].
    feature_align: 128 everywhere; bump to 256 on v6e/v7x for large odd hidden
    dims (256x256 MXU tiles).  data_dim is intentionally NOT padded: for small
    data_dim the masked first-layer loads are cheaper than 8x more x DMA.
    """
    w1, b1 = params["l1"]
    w2, b2 = params["l2"]
    w3, b3 = params["l3"]
    wmu, bmu = params["mu"]
    wls, bls = params["log_sigma"]

    data_dim, hidden_dim = w1.shape
    z_dim = wmu.shape[1]
    Hp = _round_up(hidden_dim, feature_align)
    Zc = _round_up(2 * z_dim, feature_align)        # fused mu||log_sigma head

    def pad2(a, rows, cols):
        return jnp.pad(a, ((0, rows - a.shape[0]), (0, cols - a.shape[1])))

    # Zero-padding propagates exactly (padded weight rows/cols and biases are 0,
    # ReLU(0) = 0), so padded feature columns stay exactly zero and are sliced off.
    packed = {
        "w1": pad2(w1, data_dim, Hp).astype(jnp.bfloat16),
        "w2": pad2(w2, Hp, Hp).astype(jnp.bfloat16),
        "w3": pad2(w3, Hp, Hp).astype(jnp.bfloat16),
        "wh": pad2(jnp.concatenate([wmu, wls], axis=1), Hp, Zc).astype(jnp.bfloat16),
        "b1": pad2(b1, 1, Hp),
        "b2": pad2(b2, 1, Hp),
        "b3": pad2(b3, 1, Hp),
        "bh": pad2(jnp.concatenate([bmu, bls], axis=1), 1, Zc),
        "dims": (int(data_dim), int(hidden_dim), int(z_dim), int(Hp), int(Zc)),
    }
    return packed


# ---------------------------------------------------------------------------
# Tiling helpers
# ---------------------------------------------------------------------------
def _choose_batch_tile(B, batch_tile):
    """Return (bt, Bp): a 128-multiple batch tile with >=2 grid steps when the
    padded batch allows it (so v7x's second TensorCore gets work)."""
    if B <= 128:
        bt = max(8, _round_up(B, 8))      # tiny batch: minimize row padding
        return bt, bt
    Bp = _round_up(B, 128)
    cap = max(128, (min(batch_tile, Bp) // 128) * 128)
    if Bp >= 256:
        cap = min(cap, max(128, ((Bp // 2) // 128) * 128))   # >=2 grid steps
    bt = 128
    for cand in range(cap, 127, -128):    # largest 128-multiple divisor of Bp
        if Bp % cand == 0:
            bt = cand
            break
    return bt, Bp


def _vmem_limit_bytes(bt, data_dim, Hp, Zc, x_itemsize, weight_bufs):
    x_tile = bt * data_dim * x_itemsize * 2                 # double-buffered input
    out_tile = bt * Zc * 4 * 2                               # double-buffered output
    weights = (data_dim * Hp + 2 * Hp * Hp + Hp * Zc) * 2 * weight_bufs
    biases = (3 * Hp + Zc) * 4 * weight_bufs
    interm = 3 * bt * Hp * 4 + bt * Zc * 4                   # staged f32 intermediates
    need = x_tile + out_tile + weights + biases + interm
    # generous headroom for compiler-internal scratch, capped below physical VMEM
    return int(min(max(2 * need, 16 << 20), 96 << 20))


# ---------------------------------------------------------------------------
# Forward
# ---------------------------------------------------------------------------
def encoder_forward(x, packed, *, batch_tile=512):
    """x: [B, data_dim] float32.  packed: output of prepare_encoder_params.

    Returns (mu, log_sigma), each [B, z_dim] float32.
    """
    data_dim, hidden_dim, z_dim, Hp, Zc = packed["dims"]
    B, xd = x.shape
    assert xd == data_dim

    bt, Bp = _choose_batch_tile(B, batch_tile)

    # If we must pad the batch anyway, emit the padded x directly in bf16
    # (halves the streamed x DMA); otherwise keep f32 and cast in-kernel.
    if Bp != B:
        xp = jnp.pad(x, ((0, Bp - B), (0, 0))).astype(jnp.bfloat16)
    else:
        xp = x

    grid = (Bp // bt,)

    w1p, b1p = packed["w1"], packed["b1"]
    w2p, b2p = packed["w2"], packed["b2"]
    w3p, b3p = packed["w3"], packed["b3"]
    whp, bhp = packed["wh"], packed["bh"]

    def make_in_specs(single_buffer_weights):
        def whole(a):
            nd = a.ndim
            idx = lambda i, _nd=nd: (0,) * _nd
            if single_buffer_weights:
                # Constant index_map => re-fetch/double-buffer buys nothing;
                # single-buffering halves resident weight VMEM (key on v7x).
                return pl.BlockSpec(a.shape, idx, pipeline_mode=pl.Buffered(1))
            return pl.BlockSpec(a.shape, idx)

        return [
            pl.BlockSpec((bt, data_dim), lambda i: (i, 0)),   # x tile (streamed)
            whole(w1p), whole(b1p),
            whole(w2p), whole(b2p),
            whole(w3p), whole(b3p),
            whole(whp), whole(bhp),
        ]

    out_spec = pl.BlockSpec((bt, Zc), lambda i: (i, 0))

    flops = 2 * Bp * (data_dim * Hp + 2 * Hp * Hp + Hp * Zc)
    bytes_accessed = (xp.size * xp.dtype.itemsize
                      + (w1p.size + w2p.size + w3p.size + whp.size) * 2
                      + (b1p.size + b2p.size + b3p.size + bhp.size) * 4
                      + Bp * Zc * 4)
    cost = pl.CostEstimate(flops=flops, transcendentals=0,
                           bytes_accessed=bytes_accessed)

    def run(single_buffer_weights):
        weight_bufs = 1 if single_buffer_weights else 2
        vmem_limit = _vmem_limit_bytes(bt, data_dim, Hp, Zc,
                                       xp.dtype.itemsize, weight_bufs)
        call = pl.pallas_call(
            _encoder_kernel,
            out_shape=jax.ShapeDtypeStruct((Bp, Zc), jnp.float32),
            grid_spec=pltpu.PrefetchScalarGridSpec(
                num_scalar_prefetch=0,
                grid=grid,
                in_specs=make_in_specs(single_buffer_weights),
                out_specs=out_spec,
            ),
            compiler_params=pltpu.CompilerParams(
                dimension_semantics=("parallel",),   # shard batch tiles over TCs
                vmem_limit_bytes=vmem_limit),
            cost_estimate=cost,
        )
        return call(xp, w1p, b1p, w2p, b2p, w3p, b3p, whp, bhp)

    try:
        out = run(single_buffer_weights=True)
    except Exception:
        # pl.Buffered(1) not accepted by this JAX/Mosaic version ->
        # fall back to default (double-buffered) weight blocks.
        out = run(single_buffer_weights=False)

    mu = out[:B, :z_dim]
    log_sigma = out[:B, z_dim:2 * z_dim]
    return mu, log_sigma


# ---------------------------------------------------------------------------
# Params init + pure-JAX reference
# ---------------------------------------------------------------------------
def init_encoder_params(key, data_dim, hidden_dim, z_dim):
    """Deterministic init mimicking nn.Linear's U(-1/sqrt(fan_in), 1/sqrt(fan_in)).
    Weights stored as [in_features, out_features] (transpose of PyTorch layout)."""
    def linear(k, fan_in, fan_out):
        kw, kb = jax.random.split(k)
        bound = 1.0 / jnp.sqrt(jnp.float32(fan_in))
        w = jax.random.uniform(kw, (fan_in, fan_out), jnp.float32, -bound, bound)
        b = jax.random.uniform(kb, (1, fan_out), jnp.float32, -bound, bound)
        return w, b

    k1, k2, k3, k4, k5 = jax.random.split(key, 5)
    return {
        "l1": linear(k1, data_dim, hidden_dim),
        "l2": linear(k2, hidden_dim, hidden_dim),
        "l3": linear(k3, hidden_dim, hidden_dim),
        "mu": linear(k4, hidden_dim, z_dim),
        "log_sigma": linear(k5, hidden_dim, z_dim),
    }


def encoder_reference(x, params):
    """Pure-JAX reference with the same bf16 operand rounding as the kernel."""
    def bf(a):
        return a.astype(jnp.bfloat16).astype(jnp.float32)

    def mm(a, b):
        return jnp.dot(bf(a), bf(b), precision=lax.Precision.HIGHEST)

    w1, b1 = params["l1"]
    w2, b2 = params["l2"]
    w3, b3 = params["l3"]
    wmu, bmu = params["mu"]
    wls, bls = params["log_sigma"]
    h = jnp.maximum(mm(x, w1) + b1, 0.0)
    h = jnp.maximum(mm(h, w2) + b2, 0.0)
    h = jnp.maximum(mm(h, w3) + b3, 0.0)
    return mm(h, wmu) + bmu, mm(h, wls) + bls


if __name__ == "__main__":
    data_dim, hidden_dim, z_dim = 16, 32, 8
    batch = 256

    key = jax.random.PRNGKey(0)
    k_params, k_x = jax.random.split(key)
    params = init_encoder_params(k_params, data_dim, hidden_dim, z_dim)
    x = jax.random.normal(k_x, (batch, data_dim), jnp.float32)

    # One-time packing (padded + bf16 weights) — kept out of the per-call path.
    packed = prepare_encoder_params(params)

    # batch=256 -> bt=128, 2 grid steps (exercises pipelining / megacore sharding).
    mu, log_sigma = encoder_forward(x, packed, batch_tile=512)
    mu = jax.block_until_ready(mu)
    log_sigma = jax.block_until_ready(log_sigma)

    mu_ref, ls_ref = encoder_reference(x, params)
    assert mu.shape == (batch, z_dim)
    assert log_sigma.shape == (batch, z_dim)
    assert jnp.allclose(mu, mu_ref, atol=1e-2, rtol=1e-2), "mu mismatch vs reference"
    assert jnp.allclose(log_sigma, ls_ref, atol=1e-2, rtol=1e-2), "log_sigma mismatch vs reference"

    print("KERNEL_OK")
</pallas_src>

<mosaic_0001>
module attributes {stable_mosaic.version = 11 : i64} {
  func.func @_encoder_kernel(%arg0: i32, %arg1: memref<128x16xf32, #tpu.memory_space<vmem>>, %arg2: memref<16x128xbf16, #tpu.memory_space<vmem>>, %arg3: memref<1x128xf32, #tpu.memory_space<vmem>>, %arg4: memref<128x128xbf16, #tpu.memory_space<vmem>>, %arg5: memref<1x128xf32, #tpu.memory_space<vmem>>, %arg6: memref<128x128xbf16, #tpu.memory_space<vmem>>, %arg7: memref<1x128xf32, #tpu.memory_space<vmem>>, %arg8: memref<128x128xbf16, #tpu.memory_space<vmem>>, %arg9: memref<1x128xf32, #tpu.memory_space<vmem>>, %arg10: memref<128x128xf32, #tpu.memory_space<vmem>>) attributes {dimension_semantics = [#tpu.dimension_semantics<parallel>], iteration_bounds = array<i64: 2>, scalar_prefetch = 0 : i64, scratch_operands = 0 : i64, tpu.core_type = #tpu.core_type<tc>, window_params = [{transform_indices = @transform_0, window_bounds = array<i64: 128, 16>}, {pipeline_mode = #tpu.pipeline_mode<synchronous>, transform_indices = @transform_1, window_bounds = array<i64: 16, 128>}, {pipeline_mode = #tpu.pipeline_mode<synchronous>, transform_indices = @transform_2, window_bounds = array<i64: 1, 128>}, {pipeline_mode = #tpu.pipeline_mode<synchronous>, transform_indices = @transform_3, window_bounds = array<i64: 128, 128>}, {pipeline_mode = #tpu.pipeline_mode<synchronous>, transform_indices = @transform_4, window_bounds = array<i64: 1, 128>}, {pipeline_mode = #tpu.pipeline_mode<synchronous>, transform_indices = @transform_5, window_bounds = array<i64: 128, 128>}, {pipeline_mode = #tpu.pipeline_mode<synchronous>, transform_indices = @transform_6, window_bounds = array<i64: 1, 128>}, {pipeline_mode = #tpu.pipeline_mode<synchronous>, transform_indices = @transform_7, window_bounds = array<i64: 128, 128>}, {pipeline_mode = #tpu.pipeline_mode<synchronous>, transform_indices = @transform_8, window_bounds = array<i64: 1, 128>}, {transform_indices = @transform_9, window_bounds = array<i64: 128, 128>}]} {
    %c0 = arith.constant 0 : index
    %c0_0 = arith.constant 0 : index
    %0 = vector.load %arg1[%c0, %c0_0] : memref<128x16xf32, #tpu.memory_space<vmem>>, vector<128x16xf32>
    %1 = arith.truncf %0 : vector<128x16xf32> to vector<128x16xbf16>
    %c0_1 = arith.constant 0 : index
    %c0_2 = arith.constant 0 : index
    %2 = vector.load %arg2[%c0_1, %c0_2] : memref<16x128xbf16, #tpu.memory_space<vmem>>, vector<16x128xbf16>
    %cst = arith.constant dense<0.000000e+00> : vector<128x128xf32>
    %3 = tpu.matmul %1, %2, %cst {dimension_numbers = #tpu.dot_dimension_numbers<[1], [0], [0], [1], [0, 0, 1, 1], [], []>} : vector<128x16xbf16>, vector<16x128xbf16>, vector<128x128xf32> -> vector<128x128xf32>
    %c0_3 = arith.constant 0 : index
    %c0_4 = arith.constant 0 : index
    %4 = vector.load %arg3[%c0_3, %c0_4] : memref<1x128xf32, #tpu.memory_space<vmem>>, vector<1x128xf32>
    %5 = vector.broadcast %4 : vector<1x128xf32> to vector<128x128xf32>
    %6 = arith.addf %3, %5 : vector<128x128xf32>
    %cst_5 = arith.constant 0.000000e+00 : f32
    %7 = vector.broadcast %cst_5 : f32 to vector<128x128xf32>
    %8 = arith.maximumf %6, %7 : vector<128x128xf32>
    %9 = arith.truncf %8 : vector<128x128xf32> to vector<128x128xbf16>
    %c0_6 = arith.constant 0 : index
    %c0_7 = arith.constant 0 : index
    %10 = vector.load %arg4[%c0_6, %c0_7] : memref<128x128xbf16, #tpu.memory_space<vmem>>, vector<128x128xbf16>
    %cst_8 = arith.constant dense<0.000000e+00> : vector<128x128xf32>
    %11 = tpu.matmul %9, %10, %cst_8 {dimension_numbers = #tpu.dot_dimension_numbers<[1], [0], [0], [1], [0, 0, 1, 1], [], []>} : vector<128x128xbf16>, vector<128x128xbf16>, vector<128x128xf32> -> vector<128x128xf32>
    %c0_9 = arith.constant 0 : index
    %c0_10 = arith.constant 0 : index
    %12 = vector.load %arg5[%c0_9, %c0_10] : memref<1x128xf32, #tpu.memory_space<vmem>>, vector<1x128xf32>
    %13 = vector.broadcast %12 : vector<1x128xf32> to vector<128x128xf32>
    %14 = arith.addf %11, %13 : vector<128x128xf32>
    %cst_11 = arith.constant 0.000000e+00 : f32
    %15 = vector.broadcast %cst_11 : f32 to vector<128x128xf32>
    %16 = arith.maximumf %14, %15 : vector<128x128xf32>
    %17 = arith.truncf %16 : vector<128x128xf32> to vector<128x128xbf16>
    %c0_12 = arith.constant 0 : index
    %c0_13 = arith.constant 0 : index
    %18 = vector.load %arg6[%c0_12, %c0_13] : memref<128x128xbf16, #tpu.memory_space<vmem>>, vector<128x128xbf16>
    %cst_14 = arith.constant dense<0.000000e+00> : vector<128x128xf32>
    %19 = tpu.matmul %17, %18, %cst_14 {dimension_numbers = #tpu.dot_dimension_numbers<[1], [0], [0], [1], [0, 0, 1, 1], [], []>} : vector<128x128xbf16>, vector<128x128xbf16>, vector<128x128xf32> -> vector<128x128xf32>
    %c0_15 = arith.constant 0 : index
    %c0_16 = arith.constant 0 : index
    %20 = vector.load %arg7[%c0_15, %c0_16] : memref<1x128xf32, #tpu.memory_space<vmem>>, vector<1x128xf32>
    %21 = vector.broadcast %20 : vector<1x128xf32> to vector<128x128xf32>
    %22 = arith.addf %19, %21 : vector<128x128xf32>
    %cst_17 = arith.constant 0.000000e+00 : f32
    %23 = vector.broadcast %cst_17 : f32 to vector<128x128xf32>
    %24 = arith.maximumf %22, %23 : vector<128x128xf32>
    %25 = arith.truncf %24 : vector<128x128xf32> to vector<128x128xbf16>
    %c0_18 = arith.constant 0 : index
    %c0_19 = arith.constant 0 : index
    %26 = vector.load %arg8[%c0_18, %c0_19] : memref<128x128xbf16, #tpu.memory_space<vmem>>, vector<128x128xbf16>
    %cst_20 = arith.constant dense<0.000000e+00> : vector<128x128xf32>
    %27 = tpu.matmul %25, %26, %cst_20 {dimension_numbers = #tpu.dot_dimension_numbers<[1], [0], [0], [1], [0, 0, 1, 1], [], []>} : vector<128x128xbf16>, vector<128x128xbf16>, vector<128x128xf32> -> vector<128x128xf32>
    %c0_21 = arith.constant 0 : index
    %c0_22 = arith.constant 0 : index
    %28 = vector.load %arg9[%c0_21, %c0_22] : memref<1x128xf32, #tpu.memory_space<vmem>>, vector<1x128xf32>
    %29 = vector.broadcast %28 : vector<1x128xf32> to vector<128x128xf32>
    %30 = arith.addf %27, %29 : vector<128x128xf32>
    %c0_23 = arith.constant 0 : index
    %c0_24 = arith.constant 0 : index
    %31 = vector.load %arg10[%c0_23, %c0_24] : memref<128x128xf32, #tpu.memory_space<vmem>>, vector<128x128xf32>
    tpu.vector_store %arg10[%c0_23, %c0_24], %30 {strides = array<i32>} : memref<128x128xf32, #tpu.memory_space<vmem>>, vector<128x128xf32>,
    return
  }
  func.func @transform_0(%arg0: i32) -> (i32, i32) {
    %c0_i32 = arith.constant 0 : i32
    %c0_i32_0 = arith.constant 0 : i32
    return %arg0, %c0_i32 : i32, i32
  }
  func.func @transform_1(%arg0: i32) -> (i32, i32) {
    %c0_i32 = arith.constant 0 : i32
    %c0_i32_0 = arith.constant 0 : i32
    %c0_i32_1 = arith.constant 0 : i32
    return %c0_i32, %c0_i32_0 : i32, i32
  }
  func.func @transform_2(%arg0: i32) -> (i32, i32) {
    %c0_i32 = arith.constant 0 : i32
    %c0_i32_0 = arith.constant 0 : i32
    %c0_i32_1 = arith.constant 0 : i32
    return %c0_i32, %c0_i32_0 : i32, i32
  }
  func.func @transform_3(%arg0: i32) -> (i32, i32) {
    %c0_i32 = arith.constant 0 : i32
    %c0_i32_0 = arith.constant 0 : i32
    %c0_i32_1 = arith.constant 0 : i32
    return %c0_i32, %c0_i32_0 : i32, i32
  }
  func.func @transform_4(%arg0: i32) -> (i32, i32) {
    %c0_i32 = arith.constant 0 : i32
    %c0_i32_0 = arith.constant 0 : i32
    %c0_i32_1 = arith.constant 0 : i32
    return %c0_i32, %c0_i32_0 : i32, i32
  }
  func.func @transform_5(%arg0: i32) -> (i32, i32) {
    %c0_i32 = arith.constant 0 : i32
    %c0_i32_0 = arith.constant 0 : i32
    %c0_i32_1 = arith.constant 0 : i32
    return %c0_i32, %c0_i32_0 : i32, i32
  }
  func.func @transform_6(%arg0: i32) -> (i32, i32) {
    %c0_i32 = arith.constant 0 : i32
    %c0_i32_0 = arith.constant 0 : i32
    %c0_i32_1 = arith.constant 0 : i32
    return %c0_i32, %c0_i32_0 : i32, i32
  }
  func.func @transform_7(%arg0: i32) -> (i32, i32) {
    %c0_i32 = arith.constant 0 : i32
    %c0_i32_0 = arith.constant 0 : i32
    %c0_i32_1 = arith.constant 0 : i32
    return %c0_i32, %c0_i32_0 : i32, i32
  }
  func.func @transform_8(%arg0: i32) -> (i32, i32) {
    %c0_i32 = arith.constant 0 : i32
    %c0_i32_0 = arith.constant 0 : i32
    %c0_i32_1 = arith.constant 0 : i32
    return %c0_i32, %c0_i32_0 : i32, i32
  }
  func.func @transform_9(%arg0: i32) -> (i32, i32) {
    %c0_i32 = arith.constant 0 : i32
    %c0_i32_0 = arith.constant 0 : i32
    return %arg0, %c0_i32 : i32, i32
  }
}

module attributes {stable_mosaic.version = 11 : i64} {
  func.func @_encoder_kernel(%arg0: i32, %arg1: memref<128x16xf32, #tpu.memory_space<vmem>>, %arg2: memref<16x128xbf16, #tpu.memory_space<vmem>>, %arg3: memref<1x128xf32, #tpu.memory_space<vmem>>, %arg4: memref<128x128xbf16, #tpu.memory_space<vmem>>, %arg5: memref<1x128xf32, #tpu.memory_space<vmem>>, %arg6: memref<128x128xbf16, #tpu.memory_space<vmem>>, %arg7: memref<1x128xf32, #tpu.memory_space<vmem>>, %arg8: memref<128x128xbf16, #tpu.memory_space<vmem>>, %arg9: memref<1x128xf32, #tpu.memory_space<vmem>>, %arg10: memref<128x128xf32, #tpu.memory_space<vmem>>) attributes {dimension_semantics = [#tpu.dimension_semantics<parallel>], iteration_bounds = array<i64: 2>, scalar_prefetch = 0 : i64, scratch_operands = 0 : i64, tpu.core_type = #tpu.core_type<tc>, window_params = [{transform_indices = @transform_0, window_bounds = array<i64: 128, 16>}, {pipeline_mode = #tpu.pipeline_mode<synchronous>, transform_indices = @transform_1, window_bounds = array<i64: 16, 128>}, {pipeline_mode = #tpu.pipeline_mode<synchronous>, transform_indices = @transform_2, window_bounds = array<i64: 1, 128>}, {pipeline_mode = #tpu.pipeline_mode<synchronous>, transform_indices = @transform_3, window_bounds = array<i64: 128, 128>}, {pipeline_mode = #tpu.pipeline_mode<synchronous>, transform_indices = @transform_4, window_bounds = array<i64: 1, 128>}, {pipeline_mode = #tpu.pipeline_mode<synchronous>, transform_indices = @transform_5, window_bounds = array<i64: 128, 128>}, {pipeline_mode = #tpu.pipeline_mode<synchronous>, transform_indices = @transform_6, window_bounds = array<i64: 1, 128>}, {pipeline_mode = #tpu.pipeline_mode<synchronous>, transform_indices = @transform_7, window_bounds = array<i64: 128, 128>}, {pipeline_mode = #tpu.pipeline_mode<synchronous>, transform_indices = @transform_8, window_bounds = array<i64: 1, 128>}, {transform_indices = @transform_9, window_bounds = array<i64: 128, 128>}]} {
    %c0 = arith.constant 0 : index
    %c0_0 = arith.constant 0 : index
    %0 = vector.load %arg1[%c0, %c0_0] : memref<128x16xf32, #tpu.memory_space<vmem>>, vector<128x16xf32>
    %1 = arith.truncf %0 : vector<128x16xf32> to vector<128x16xbf16>
    %c0_1 = arith.constant 0 : index
    %c0_2 = arith.constant 0 : index
    %2 = vector.load %arg2[%c0_1, %c0_2] : memref<16x128xbf16, #tpu.memory_space<vmem>>, vector<16x128xbf16>
    %cst = arith.constant dense<0.000000e+00> : vector<128x128xf32>
    %3 = tpu.matmul %1, %2, %cst {dimension_numbers = #tpu.dot_dimension_numbers<[1], [0], [0], [1], [0, 0, 1, 1], [], []>} : vector<128x16xbf16>, vector<16x128xbf16>, vector<128x128xf32> -> vector<128x128xf32>
    %c0_3 = arith.constant 0 : index
    %c0_4 = arith.constant 0 : index
    %4 = vector.load %arg3[%c0_3, %c0_4] : memref<1x128xf32, #tpu.memory_space<vmem>>, vector<1x128xf32>
    %5 = vector.broadcast %4 : vector<1x128xf32> to vector<128x128xf32>
    %6 = arith.addf %3, %5 : vector<128x128xf32>
    %cst_5 = arith.constant 0.000000e+00 : f32
    %7 = vector.broadcast %cst_5 : f32 to vector<128x128xf32>
    %8 = arith.maximumf %6, %7 : vector<128x128xf32>
    %9 = arith.truncf %8 : vector<128x128xf32> to vector<128x128xbf16>
    %c0_6 = arith.constant 0 : index
    %c0_7 = arith.constant 0 : index
    %10 = vector.load %arg4[%c0_6, %c0_7] : memref<128x128xbf16, #tpu.memory_space<vmem>>, vector<128x128xbf16>
    %cst_8 = arith.constant dense<0.000000e+00> : vector<128x128xf32>
    %11 = tpu.matmul %9, %10, %cst_8 {dimension_numbers = #tpu.dot_dimension_numbers<[1], [0], [0], [1], [0, 0, 1, 1], [], []>} : vector<128x128xbf16>, vector<128x128xbf16>, vector<128x128xf32> -> vector<128x128xf32>
    %c0_9 = arith.constant 0 : index
    %c0_10 = arith.constant 0 : index
    %12 = vector.load %arg5[%c0_9, %c0_10] : memref<1x128xf32, #tpu.memory_space<vmem>>, vector<1x128xf32>
    %13 = vector.broadcast %12 : vector<1x128xf32> to vector<128x128xf32>
    %14 = arith.addf %11, %13 : vector<128x128xf32>
    %cst_11 = arith.constant 0.000000e+00 : f32
    %15 = vector.broadcast %cst_11 : f32 to vector<128x128xf32>
    %16 = arith.maximumf %14, %15 : vector<128x128xf32>
    %17 = arith.truncf %16 : vector<128x128xf32> to vector<128x128xbf16>
    %c0_12 = arith.constant 0 : index
    %c0_13 = arith.constant 0 : index
    %18 = vector.load %arg6[%c0_12, %c0_13] : memref<128x128xbf16, #tpu.memory_space<vmem>>, vector<128x128xbf16>
    %cst_14 = arith.constant dense<0.000000e+00> : vector<128x128xf32>
    %19 = tpu.matmul %17, %18, %cst_14 {dimension_numbers = #tpu.dot_dimension_numbers<[1], [0], [0], [1], [0, 0, 1, 1], [], []>} : vector<128x128xbf16>, vector<128x128xbf16>, vector<128x128xf32> -> vector<128x128xf32>
    %c0_15 = arith.constant 0 : index
    %c0_16 = arith.constant 0 : index
    %20 = vector.load %arg7[%c0_15, %c0_16] : memref<1x128xf32, #tpu.memory_space<vmem>>, vector<1x128xf32>
    %21 = vector.broadcast %20 : vector<1x128xf32> to vector<128x128xf32>
    %22 = arith.addf %19, %21 : vector<128x128xf32>
    %cst_17 = arith.constant 0.000000e+00 : f32
    %23 = vector.broadcast %cst_17 : f32 to vector<128x128xf32>
    %24 = arith.maximumf %22, %23 : vector<128x128xf32>
    %25 = arith.truncf %24 : vector<128x128xf32> to vector<128x128xbf16>
    %c0_18 = arith.constant 0 : index
    %c0_19 = arith.constant 0 : index
    %26 = vector.load %arg8[%c0_18, %c0_19] : memref<128x128xbf16, #tpu.memory_space<vmem>>, vector<128x128xbf16>
    %cst_20 = arith.constant dense<0.000000e+00> : vector<128x128xf32>
    %27 = tpu.matmul %25, %26, %cst_20 {dimension_numbers = #tpu.dot_dimension_numbers<[1], [0], [0], [1], [0, 0, 1, 1], [], []>} : vector<128x128xbf16>, vector<128x128xbf16>, vector<128x128xf32> -> vector<128x128xf32>
    %c0_21 = arith.constant 0 : index
    %c0_22 = arith.constant 0 : index
    %28 = vector.load %arg9[%c0_21, %c0_22] : memref<1x128xf32, #tpu.memory_space<vmem>>, vector<1x128xf32>
    %29 = vector.broadcast %28 : vector<1x128xf32> to vector<128x128xf32>
    %30 = arith.addf %27, %29 : vector<128x128xf32>
    %c0_23 = arith.constant 0 : index
    %c0_24 = arith.constant 0 : index
    %31 = vector.load %arg10[%c0_23, %c0_24] : memref<128x128xf32, #tpu.memory_space<vmem>>, vector<128x128xf32>
    tpu.vector_store %arg10[%c0_23, %c0_24], %30 {strides = array<i32>} : memref<128x128xf32, #tpu.memory_space<vmem>>, vector<128x128xf32>,
    return
  }
  func.func @transform_0(%arg0: i32) -> (i32, i32) {
    %c0_i32 = arith.constant 0 : i32
    %c0_i32_0 = arith.constant 0 : i32
    return %arg0, %c0_i32 : i32, i32
  }
  func.func @transform_1(%arg0: i32) -> (i32, i32) {
    %c0_i32 = arith.constant 0 : i32
    %c0_i32_0 = arith.constant 0 : i32
    %c0_i32_1 = arith.constant 0 : i32
    return %c0_i32, %c0_i32_0 : i32, i32
  }
  func.func @transform_2(%arg0: i32) -> (i32, i32) {
    %c0_i32 = arith.constant 0 : i32
    %c0_i32_0 = arith.constant 0 : i32
    %c0_i32_1 = arith.constant 0 : i32
    return %c0_i32, %c0_i32_0 : i32, i32
  }
  func.func @transform_3(%arg0: i32) -> (i32, i32) {
    %c0_i32 = arith.constant 0 : i32
    %c0_i32_0 = arith.constant 0 : i32
    %c0_i32_1 = arith.constant 0 : i32
    return %c0_i32, %c0_i32_0 : i32, i32
  }
  func.func @transform_4(%arg0: i32) -> (i32, i32) {
    %c0_i32 = arith.constant 0 : i32
    %c0_i32_0 = arith.constant 0 : i32
    %c0_i32_1 = arith.constant 0 : i32
    return %c0_i32, %c0_i32_0 : i32, i32
  }
  func.func @transform_5(%arg0: i32) -> (i32, i32) {
    %c0_i32 = arith.constant 0 : i32
    %c0_i32_0 = arith.constant 0 : i32
    %c0_i32_1 = arith.constant 0 : i32
    return %c0_i32, %c0_i32_0 : i32, i32
  }
  func.func @transform_6(%arg0: i32) -> (i32, i32) {
    %c0_i32 = arith.constant 0 : i32
    %c0_i32_0 = arith.constant 0 : i32
    %c0_i32_1 = arith.constant 0 : i32
    return %c0_i32, %c0_i32_0 : i32, i32
  }
  func.func @transform_7(%arg0: i32) -> (i32, i32) {
    %c0_i32 = arith.constant 0 : i32
    %c0_i32_0 = arith.constant 0 : i32
    %c0_i32_1 = arith.constant 0 : i32
    return %c0_i32, %c0_i32_0 : i32, i32
  }
  func.func @transform_8(%arg0: i32) -> (i32, i32) {
    %c0_i32 = arith.constant 0 : i32
    %c0_i32_0 = arith.constant 0 : i32
    %c0_i32_1 = arith.constant 0 : i32
    return %c0_i32, %c0_i32_0 : i32, i32
  }
  func.func @transform_9(%arg0: i32) -> (i32, i32) {
    %c0_i32 = arith.constant 0 : i32
    %c0_i32_0 = arith.constant 0 : i32
    return %arg0, %c0_i32 : i32, i32
  }
}

</mosaic_0001>

<llo_original>
// kernel: tpu_custom_call.1
$region0: #{tpu_custom_call.1}
  #allocation0 [shape = 'u32[]', space=smem, size = 0x4, offset = 0x4, fixed_abs, tag = 'smem constant byte address 0x4 - core index']
  #allocation1 [shape = 'u32[144,128]{1,0:T(1,128)}', space=vmem, size = 0x12000, scoped, tag = 'internal scratch']
  %s0 = inlined_call_operand.vmem [shape: f32[256,16], index: 0, kind: input, shape index: {}]
  %s1 = inlined_call_operand.vmem [shape: bf16[16,128], index: 1, kind: input, shape index: {}]
  %s2 = inlined_call_operand.vmem [shape: f32[1,128], index: 2, kind: input, shape index: {}]
  %s3 = inlined_call_operand.vmem [shape: bf16[128,128], index: 3, kind: input, shape index: {}]
  %s4 = inlined_call_operand.vmem [shape: f32[1,128], index: 4, kind: input, shape index: {}]
  %s5 = inlined_call_operand.vmem [shape: bf16[128,128], index: 5, kind: input, shape index: {}]
  %s6 = inlined_call_operand.vmem [shape: f32[1,128], index: 6, kind: input, shape index: {}]
  %s7 = inlined_call_operand.vmem [shape: bf16[128,128], index: 7, kind: input, shape index: {}]
  %s8 = inlined_call_operand.vmem [shape: f32[1,128], index: 8, kind: input, shape index: {}]
  %s9 = inlined_call_operand.hbm [shape: f32[256,128], index: 9, kind: output, shape index: {}]
  %s10 = sld [smem:[#allocation0]]
  $region69: #{tpu_custom_call.1} parent=0
    _
  %s12 = ssub.s32 1, %s10
  %s13 = scalar_select 0, %s12, %s10
  $region1: #{tpu_custom_call.1} parent=0
    #allocation2 [shape = 'u8[131072]{0}', space=vmem, size = 0x20000, scoped, tag = 'output window, operand 0']
    #allocation3 [shape = 's32[2]{0}', space=sflag, size = 0x8, scoped, tag = 'scoped memory for tpu_custom_call.1']
    %14 = vsyncpa [#allocation3], 0
    %s15 = scalar_lea.sflag [#allocation3], 1
    %16 = vsyncpa %s15, 0
    loop: start=0, step=1, limit=4
    $region2: #{tpu_custom_call.1} parent=1 // loop_pre_header
      _
    $region3: #{tpu_custom_call.1} parent=1 // loop_header
      %s18 = sphi 0, %s22
      %p19 = scmp.ge.s32.totalorder %s18, 4
      %s28 = sphi 0, %s30
      %s31 = sphi 0, %s28
      %s32 = sphi 0, %s31
      %s48 = sphi 0, %s32
      %s52 = sphi 0, %s52
      %s54 = sphi 0, %s52
      %s55 = sphi 0, %s54
      %s69 = sphi 0, %s55
      %s73 = sphi 0, %s73
      %s75 = sphi 0, %s73
      %s76 = sphi 0, %s75
      %s90 = sphi 0, %s76
      %s94 = sphi 0, %s94
      %s96 = sphi 0, %s94
      %s97 = sphi 0, %s96
      %s111 = sphi 0, %s97
      %s115 = sphi 0, %s115
      %s117 = sphi 0, %s115
      %s118 = sphi 0, %s117
      %s132 = sphi 0, %s118
      %s136 = sphi 0, %s136
      %s138 = sphi 0, %s136
      %s139 = sphi 0, %s138
      %s153 = sphi 0, %s139
      %s157 = sphi 0, %s157
      %s159 = sphi 0, %s157
      %s160 = sphi 0, %s159
      %s174 = sphi 0, %s160
      %s178 = sphi 0, %s178
      %s180 = sphi 0, %s178
      %s181 = sphi 0, %s180
      %s195 = sphi 0, %s181
      %s199 = sphi 0, %s199
      %s201 = sphi 0, %s199
      %s202 = sphi 0, %s201
      %s216 = sphi 0, %s202
      %s222 = sphi 0, %s224
      %s225 = sphi 0, %s222
      %s226 = sphi 0, %s225
      %s242 = sphi 0, %s226
    $region4: #{tpu_custom_call.1} parent=1 // loop_header_branch
      %21 = sbr.rel (%p19) target = $region8
    $region5: #{tpu_custom_call.1} parent=1 // loop_body
      %s23 = ssub.s32 %s18, 1
      %s24 = ssub.s32 %s18, 2
      %s25 = sadd.s32 %s18, 1
      %s26 = ssub.s32 %s18, %s25
      %p27 = scmp.eq.s32.totalorder %s26, 0
      %s29 = sadd.s32 %s28, 1
      %s30 = scalar_select %p27, %s28, %s29
      %p33 = pneg %p27
      %p34 = scmp.eq.s32.totalorder %s18, 1
      %p35 = por %p33, %p34
      %p36 = scmp.ne.s32.totalorder %s28, %s31
      %p37 = scmp.eq.s32.totalorder %s18, 0
      %p38 = por %p36, %p37
      %p39 = scmp.ne.s32.totalorder %s28, %s31
      %p40 = scmp.eq.s32.totalorder %s23, 1
      %p41 = por %p39, %p40
      %p42 = scmp.ne.s32.totalorder %s31, %s32
      %p43 = scmp.eq.s32.totalorder %s23, 0
      %p44 = por %p42, %p43
      %p45 = scmp.ne.s32.totalorder %s31, %s32
      %p46 = scmp.eq.s32.totalorder %s24, 1
      %p47 = por %p45, %p46
      %p49 = scmp.ne.s32.totalorder %s32, %s48
      %p50 = scmp.eq.s32.totalorder %s24, 0
      %p51 = por %p49, %p50
      %s53 = sadd.s32 %s52, 1
      %p56 = scmp.eq.s32.totalorder %s18, 1
      %p57 = scmp.ne.s32.totalorder %s52, %s54
      %p58 = scmp.eq.s32.totalorder %s18, 0
      %p59 = por %p57, %p58
      %p60 = scmp.ne.s32.totalorder %s52, %s54
      %p61 = scmp.eq.s32.totalorder %s23, 1
      %p62 = por %p60, %p61
      %p63 = scmp.ne.s32.totalorder %s54, %s55
      %p64 = scmp.eq.s32.totalorder %s23, 0
      %p65 = por %p63, %p64
      %p66 = scmp.ne.s32.totalorder %s54, %s55
      %p67 = scmp.eq.s32.totalorder %s24, 1
      %p68 = por %p66, %p67
      %p70 = scmp.ne.s32.totalorder %s55, %s69
      %p71 = scmp.eq.s32.totalorder %s24, 0
      %p72 = por %p70, %p71
      %s74 = sadd.s32 %s73, 1
      %p77 = scmp.eq.s32.totalorder %s18, 1
      %p78 = scmp.ne.s32.totalorder %s73, %s75
      %p79 = scmp.eq.s32.totalorder %s18, 0
      %p80 = por %p78, %p79
      %p81 = scmp.ne.s32.totalorder %s73, %s75
      %p82 = scmp.eq.s32.totalorder %s23, 1
      %p83 = por %p81, %p82
      %p84 = scmp.ne.s32.totalorder %s75, %s76
      %p85 = scmp.eq.s32.totalorder %s23, 0
      %p86 = por %p84, %p85
      %p87 = scmp.ne.s32.totalorder %s75, %s76
      %p88 = scmp.eq.s32.totalorder %s24, 1
      %p89 = por %p87, %p88
      %p91 = scmp.ne.s32.totalorder %s76, %s90
      %p92 = scmp.eq.s32.totalorder %s24, 0
      %p93 = por %p91, %p92
      %s95 = sadd.s32 %s94, 1
      %p98 = scmp.eq.s32.totalorder %s18, 1
      %p99 = scmp.ne.s32.totalorder %s94, %s96
      %p100 = scmp.eq.s32.totalorder %s18, 0
      %p101 = por %p99, %p100
      %p102 = scmp.ne.s32.totalorder %s94, %s96
      %p103 = scmp.eq.s32.totalorder %s23, 1
      %p104 = por %p102, %p103
      %p105 = scmp.ne.s32.totalorder %s96, %s97
      %p106 = scmp.eq.s32.totalorder %s23, 0
      %p107 = por %p105, %p106
      %p108 = scmp.ne.s32.totalorder %s96, %s97
      %p109 = scmp.eq.s32.totalorder %s24, 1
      %p110 = por %p108, %p109
      %p112 = scmp.ne.s32.totalorder %s97, %s111
      %p113 = scmp.eq.s32.totalorder %s24, 0
      %p114 = por %p112, %p113
      %s116 = sadd.s32 %s115, 1
      %p119 = scmp.eq.s32.totalorder %s18, 1
      %p120 = scmp.ne.s32.totalorder %s115, %s117
      %p121 = scmp.eq.s32.totalorder %s18, 0
      %p122 = por %p120, %p121
      %p123 = scmp.ne.s32.totalorder %s115, %s117
      %p124 = scmp.eq.s32.totalorder %s23, 1
      %p125 = por %p123, %p124
      %p126 = scmp.ne.s32.totalorder %s117, %s118
      %p127 = scmp.eq.s32.totalorder %s23, 0
      %p128 = por %p126, %p127
      %p129 = scmp.ne.s32.totalorder %s117, %s118
      %p130 = scmp.eq.s32.totalorder %s24, 1
      %p131 = por %p129, %p130
      %p133 = scmp.ne.s32.totalorder %s118, %s132
      %p134 = scmp.eq.s32.totalorder %s24, 0
      %p135 = por %p133, %p134
      %s137 = sadd.s32 %s136, 1
      %p140 = scmp.eq.s32.totalorder %s18, 1
      %p141 = scmp.ne.s32.totalorder %s136, %s138
      %p142 = scmp.eq.s32.totalorder %s18, 0
      %p143 = por %p141, %p142
      %p144 = scmp.ne.s32.totalorder %s136, %s138
      %p145 = scmp.eq.s32.totalorder %s23, 1
      %p146 = por %p144, %p145
      %p147 = scmp.ne.s32.totalorder %s138, %s139
      %p148 = scmp.eq.s32.totalorder %s23, 0
      %p149 = por %p147, %p148
      %p150 = scmp.ne.s32.totalorder %s138, %s139
      %p151 = scmp.eq.s32.totalorder %s24, 1
      %p152 = por %p150, %p151
      %p154 = scmp.ne.s32.totalorder %s139, %s153
      %p155 = scmp.eq.s32.totalorder %s24, 0
      %p156 = por %p154, %p155
      %s158 = sadd.s32 %s157, 1
      %p161 = scmp.eq.s32.totalorder %s18, 1
      %p162 = scmp.ne.s32.totalorder %s157, %s159
      %p163 = scmp.eq.s32.totalorder %s18, 0
      %p164 = por %p162, %p163
      %p165 = scmp.ne.s32.totalorder %s157, %s159
      %p166 = scmp.eq.s32.totalorder %s23, 1
      %p167 = por %p165, %p166
      %p168 = scmp.ne.s32.totalorder %s159, %s160
      %p169 = scmp.eq.s32.totalorder %s23, 0
      %p170 = por %p168, %p169
      %p171 = scmp.ne.s32.totalorder %s159, %s160
      %p172 = scmp.eq.s32.totalorder %s24, 1
      %p173 = por %p171, %p172
      %p175 = scmp.ne.s32.totalorder %s160, %s174
      %p176 = scmp.eq.s32.totalorder %s24, 0
      %p177 = por %p175, %p176
      %s179 = sadd.s32 %s178, 1
      %p182 = scmp.eq.s32.totalorder %s18, 1
      %p183 = scmp.ne.s32.totalorder %s178, %s180
      %p184 = scmp.eq.s32.totalorder %s18, 0
      %p185 = por %p183, %p184
      %p186 = scmp.ne.s32.totalorder %s178, %s180
      %p187 = scmp.eq.s32.totalorder %s23, 1
      %p188 = por %p186, %p187
      %p189 = scmp.ne.s32.totalorder %s180, %s181
      %p190 = scmp.eq.s32.totalorder %s23, 0
      %p191 = por %p189, %p190
      %p192 = scmp.ne.s32.totalorder %s180, %s181
      %p193 = scmp.eq.s32.totalorder %s24, 1
      %p194 = por %p192, %p193
      %p196 = scmp.ne.s32.totalorder %s181, %s195
      %p197 = scmp.eq.s32.totalorder %s24, 0
      %p198 = por %p196, %p197
      %s200 = sadd.s32 %s199, 1
      %p203 = scmp.eq.s32.totalorder %s18, 1
      %p204 = scmp.ne.s32.totalorder %s199, %s201
      %p205 = scmp.eq.s32.totalorder %s18, 0
      %p206 = por %p204, %p205
      %p207 = scmp.ne.s32.totalorder %s199, %s201
      %p208 = scmp.eq.s32.totalorder %s23, 1
      %p209 = por %p207, %p208
      %p210 = scmp.ne.s32.totalorder %s201, %s202
      %p211 = scmp.eq.s32.totalorder %s23, 0
      %p212 = por %p210, %p211
      %p213 = scmp.ne.s32.totalorder %s201, %s202
      %p214 = scmp.eq.s32.totalorder %s24, 1
      %p215 = por %p213, %p214
      %p217 = scmp.ne.s32.totalorder %s202, %s216
      %p218 = scmp.eq.s32.totalorder %s24, 0
      %p219 = por %p217, %p218
      %s220 = ssub.s32 %s18, %s25
      %p221 = scmp.eq.s32.totalorder %s220, 0
      %s223 = sadd.s32 %s222, 1
      %s224 = scalar_select %p221, %s222, %s223
      %p227 = pneg %p221
      %p228 = scmp.eq.s32.totalorder %s18, 1
      %p229 = por %p227, %p228
      %p230 = scmp.ne.s32.totalorder %s222, %s225
      %p231 = scmp.eq.s32.totalorder %s18, 0
      %p232 = por %p230, %p231
      %p233 = scmp.ne.s32.totalorder %s222, %s225
      %p234 = scmp.eq.s32.totalorder %s23, 1
      %p235 = por %p233, %p234
      %p236 = scmp.ne.s32.totalorder %s225, %s226
      %p237 = scmp.eq.s32.totalorder %s23, 0
      %p238 = por %p236, %p237
      %p239 = scmp.ne.s32.totalorder %s225, %s226
      %p240 = scmp.eq.s32.totalorder %s24, 1
      %p241 = por %p239, %p240
      %p243 = scmp.ne.s32.totalorder %s226, %s242
      %p244 = scmp.eq.s32.totalorder %s24, 0
      %p245 = por %p243, %p244
      %p246 = scmp.le.s32.totalorder 1, %s18
      %p247 = scmp.lt.s32.totalorder %s18, 3
      %p248 = pnand %p246, %p247
      %p249 = pneg %p248
      // Predicated region
      $region9: #{tpu_custom_call.1} parent=5 // pred_check
        _
      $region10: #{tpu_custom_call.1} parent=5 // pred_check_branch
        %251 = sbr.rel (%p248) target = $region12
      $region11: #{tpu_custom_call.1} parent=5 // pred_region
        %s252 = ssub.s32 %s18, 1
        // Predicated region
        $region13: #{tpu_custom_call.1} parent=11 // pred_check
          %p253 = pneg %p65
        $region14: #{tpu_custom_call.1} parent=11 // pred_check_branch
          %255 = sbr.rel (%p253) target = $region16
        $region15: #{tpu_custom_call.1} parent=11 // pred_region
          _
        $region16: #{tpu_custom_call.1} parent=11 // pred_fallthru
          _
        // Predicated region
        $region17: #{tpu_custom_call.1} parent=11 // pred_check
          %p256 = pneg %p86
        $region18: #{tpu_custom_call.1} parent=11 // pred_check_branch
          %258 = sbr.rel (%p256) target = $region20
        $region19: #{tpu_custom_call.1} parent=11 // pred_region
          _
        $region20: #{tpu_custom_call.1} parent=11 // pred_fallthru
          _
        // Predicated region
        $region21: #{tpu_custom_call.1} parent=11 // pred_check
          %p259 = pneg %p107
        $region22: #{tpu_custom_call.1} parent=11 // pred_check_branch
          %261 = sbr.rel (%p259) target = $region24
        $region23: #{tpu_custom_call.1} parent=11 // pred_region
          _
        $region24: #{tpu_custom_call.1} parent=11 // pred_fallthru
          _
        // Predicated region
        $region25: #{tpu_custom_call.1} parent=11 // pred_check
          %p262 = pneg %p128
        $region26: #{tpu_custom_call.1} parent=11 // pred_check_branch
          %264 = sbr.rel (%p262) target = $region28
        $region27: #{tpu_custom_call.1} parent=11 // pred_region
          _
        $region28: #{tpu_custom_call.1} parent=11 // pred_fallthru
          _
        // Predicated region
        $region29: #{tpu_custom_call.1} parent=11 // pred_check
          %p265 = pneg %p149
        $region30: #{tpu_custom_call.1} parent=11 // pred_check_branch
          %267 = sbr.rel (%p265) target = $region32
        $region31: #{tpu_custom_call.1} parent=11 // pred_region
          _
        $region32: #{tpu_custom_call.1} parent=11 // pred_fallthru
          _
        // Predicated region
        $region33: #{tpu_custom_call.1} parent=11 // pred_check
          %p268 = pneg %p170
        $region34: #{tpu_custom_call.1} parent=11 // pred_check_branch
          %270 = sbr.rel (%p268) target = $region36
        $region35: #{tpu_custom_call.1} parent=11 // pred_region
          _
        $region36: #{tpu_custom_call.1} parent=11 // pred_fallthru
          _
        // Predicated region
        $region37: #{tpu_custom_call.1} parent=11 // pred_check
          %p271 = pneg %p191
        $region38: #{tpu_custom_call.1} parent=11 // pred_check_branch
          %273 = sbr.rel (%p271) target = $region40
        $region39: #{tpu_custom_call.1} parent=11 // pred_region
          _
        $region40: #{tpu_custom_call.1} parent=11 // pred_fallthru
          _
        // Predicated region
        $region41: #{tpu_custom_call.1} parent=11 // pred_check
          %p274 = pneg %p212
        $region42: #{tpu_custom_call.1} parent=11 // pred_check_branch
          %276 = sbr.rel (%p274) target = $region44
        $region43: #{tpu_custom_call.1} parent=11 // pred_region
          _
        $region44: #{tpu_custom_call.1} parent=11 // pred_fallthru
          _
      $region12: #{tpu_custom_call.1} parent=5 // pred_fallthru
        _
      %p277 = scmp.lt.s32.totalorder %s18, 2
      // Predicated region
      $region45: #{tpu_custom_call.1} parent=5 // pred_check
        %p278 = pneg %p277
      $region46: #{tpu_custom_call.1} parent=5 // pred_check_branch
        %280 = sbr.rel (%p278) target = $region48
      $region47: #{tpu_custom_call.1} parent=5 // pred_region
        // Predicated region
        $region49: #{tpu_custom_call.1} parent=47 // pred_check
          %p281 = pneg %p38
        $region50: #{tpu_custom_call.1} parent=47 // pred_check_branch
          %283 = sbr.rel (%p281) target = $region52
        $region51: #{tpu_custom_call.1} parent=47 // pred_region
          %s284 = smul.u32 16, %s18
          %p285 = scmp.lt.s32.totalorder %s284, 31
          %s286 = scalar_select %p285, %s284, 31
          %s287 = smul.addr %s286, 8
          %s288 = scalar_lea.vmem %s0, %s287
          %s289 = smul.u32 16, %s18
        $region52: #{tpu_custom_call.1} parent=47 // pred_fallthru
          _
      $region48: #{tpu_custom_call.1} parent=5 // pred_fallthru
        _
      %p290 = scmp.le.s32.totalorder 1, %s18
      %p291 = scmp.lt.s32.totalorder %s18, 3
      %p292 = pnand %p290, %p291
      %p293 = pneg %p292
      // Predicated region
      $region53: #{tpu_custom_call.1} parent=5 // pred_check
        _
      $region54: #{tpu_custom_call.1} parent=5 // pred_check_branch
        %295 = sbr.rel (%p292) target = $region56
      $region55: #{tpu_custom_call.1} parent=5 // pred_region
        %s296 = ssub.s32 %s18, 1
        %s297 = smul.u32 16, %s23
        %p298 = scmp.lt.s32.totalorder %s297, 31
        %s299 = scalar_select %p298, %s297, 31
        %s300 = smul.addr %s299, 8
        %s301 = scalar_lea.vmem %s0, %s300
        %p302 = pneg %p44
        %p303 = pneg %p41
        %p304 = pneg %p65
        %p305 = pneg %p62
        %p306 = pneg %p86
        %p307 = pneg %p83
        %p308 = pneg %p107
        %p309 = pneg %p104
        %p310 = pneg %p128
        %p311 = pneg %p125
        %p312 = pneg %p149
        %p313 = pneg %p146
        %p314 = pneg %p170
        %p315 = pneg %p167
        %p316 = pneg %p191
        %p317 = pneg %p188
        %p318 = pneg %p212
        %p319 = pneg %p209
        %p320 = pneg %p238
        %p321 = pneg %p235
        %s322 = sand.u32 %s225, 1
        %s323 = scalar_lea.sflag [#allocation3], %s322
        %s324 = sand.u32 %s225, 1
        %s325 = smul.addr %s324, 128
        %s326 = scalar_lea.vmem [#allocation2], %s325
        %s327 = smul.u32 16, %s23
        %p328 = scmp.lt.s32.totalorder %s327, 31
        %s329 = scalar_select %p328, %s327, 31
        %s330 = smul.addr %s329, 8
        %s331 = scalar_lea.vmem %s0, %s330
        %s332 = smul.u32 16, %s23
        %s333 = smul.u32 16, %s23
        %v335 = vld [vmem:[%s331] sm:$0xff]
        %v336 = vld [vmem:[%s331 + $0x8] sm:$0xff]
        %v337 = vld [vmem:[%s331 + $0x10] sm:$0xff]
        %v338 = vld [vmem:[%s331 + $0x18] sm:$0xff]
        %v339 = vld [vmem:[%s331 + $0x20] sm:$0xff]
        %v340 = vld [vmem:[%s331 + $0x28] sm:$0xff]
        %v341 = vld [vmem:[%s331 + $0x30] sm:$0xff]
        %v342 = vld [vmem:[%s331 + $0x38] sm:$0xff]
        %v343 = vld [vmem:[%s331 + $0x40] sm:$0xff]
        %v344 = vld [vmem:[%s331 + $0x48] sm:$0xff]
        %v345 = vld [vmem:[%s331 + $0x50] sm:$0xff]
        %v346 = vld [vmem:[%s331 + $0x58] sm:$0xff]
        %v347 = vld [vmem:[%s331 + $0x60] sm:$0xff]
        %v348 = vld [vmem:[%s331 + $0x68] sm:$0xff]
        %v349 = vld [vmem:[%s331 + $0x70] sm:$0xff]
        %v350 = vld [vmem:[%s331 + $0x78] sm:$0xff]
        %v351 = vpack.c.bf16 %v336, %v335
        %v352 = vpack.c.bf16 %v338, %v337
        %v353 = vpack.c.bf16 %v340, %v339
        %v354 = vpack.c.bf16 %v342, %v341
        %v355 = vpack.c.bf16 %v344, %v343
        %v356 = vpack.c.bf16 %v346, %v345
        %v357 = vpack.c.bf16 %v348, %v347
        %v358 = vpack.c.bf16 %v350, %v349
        %v359 = vld [vmem:[%s1] sm:$0xf]
        %v360 = vld [vmem:[%s1 + $0x4] sm:$0xf]
        %v361 = vld [vmem:[%s2] sm:$0x1]
        %v363 = vlaneseq
        %v364 = vshrl.u32 %v363, 7
        %v365 = vsub.s32 0, %v364
        %v366 = vrot.slane %v361, %v365
        %v370 = vunpack.c.l.b16 %v359
        %v371 = vunpack.c.l.b16 %v360
        %v372 = vpack.c.b16 %v371, %v370
        %vm374 = vcmask 130048
        %v376 = vsel %vm374, %v351, 0
        %v379 = vsel %vm374, %v352, 0
        %v382 = vsel %vm374, %v353, 0
        %v385 = vsel %vm374, %v354, 0
        %v388 = vsel %vm374, %v355, 0
        %v391 = vsel %vm374, %v356, 0
        %v394 = vsel %vm374, %v357, 0
        %v397 = vsel %vm374, %v358, 0
        %399 = vmatprep.subr.bf16.mxu0 0
        %400 = vmatpush1.bf16.msra.mxu0 %v372
        %401 = vmatprep.subr.bf16.mxu0 0
        %402 = vmatpush1.bf16.msra.mxu0 0
        %403 = vmatprep.subr.bf16.mxu0 0
        %404 = vmatpush1.bf16.msra.mxu0 0
        %405 = vmatprep.subr.bf16.mxu0 0
        %406 = vmatpush1.bf16.msra.mxu0 0
        %407 = vmatprep.subr.bf16.mxu0 0
        %408 = vmatpush1.bf16.msra.mxu0 0
        %409 = vmatprep.subr.bf16.mxu0 0
        %410 = vmatpush1.bf16.msra.mxu0 0
        %411 = vmatprep.subr.bf16.mxu0 0
        %412 = vmatpush1.bf16.msra.mxu0 0
        %413 = vmatprep.subr.bf16.mxu0 0
        %414 = vmatpush1.bf16.msra.mxu0 0
        %415 = vmatprep.subr.bf16.mxu0 0
        %416 = vmatpush1.bf16.msra.mxu0 0
        %417 = vmatprep.subr.bf16.mxu0 0
        %418 = vmatpush1.bf16.msra.mxu0 0
        %419 = vmatprep.subr.bf16.mxu0 0
        %420 = vmatpush1.bf16.msra.mxu0 0
        %421 = vmatprep.subr.bf16.mxu0 0
        %422 = vmatpush1.bf16.msra.mxu0 0
        %423 = vmatprep.subr.bf16.mxu0 0
        %424 = vmatpush1.bf16.msra.mxu0 0
        %425 = vmatprep.subr.bf16.mxu0 0
        %426 = vmatpush1.bf16.msra.mxu0 0
        %427 = vmatprep.subr.bf16.mxu0 0
        %428 = vmatpush1.bf16.msra.mxu0 0
        %429 = vmatprep.subr.bf16.mxu0 0
        %430 = vmatpush1.bf16.msra.mxu0 0
        %431 = vmatprep.mubr.bf16.mxu0 0
        %432 = vmatmul.mubr.bf16.gmra.mrb[0].mxu0 %v376
        %v433 = vpop.f32.mrb[0].mxu0
        %v434 = vadd.f32 %v366, %v433
        %v435 = vpop.f32.mrb[0].mxu0
        %v436 = vpop.f32.mrb[0].mxu0
        %v437 = vadd.f32 %v366, %v436
        %v438 = vpop.f32.mrb[0].mxu0
        %439 = vmatprep.mubr.bf16.mxu0 0
        %440 = vmatmul.mubr.bf16.gmra.mrb[0].mxu0 %v379
        %v441 = vpop.f32.mrb[0].mxu0
        %v442 = vadd.f32 %v366, %v441
        %v443 = vpop.f32.mrb[0].mxu0
        %v444 = vpop.f32.mrb[0].mxu0
        %v445 = vadd.f32 %v366, %v444
        %v446 = vpop.f32.mrb[0].mxu0
        %447 = vmatprep.mubr.bf16.mxu0 0
        %448 = vmatmul.mubr.bf16.gmra.mrb[0].mxu0 %v382
        %v449 = vpop.f32.mrb[0].mxu0
        %v450 = vadd.f32 %v366, %v449
        %v451 = vpop.f32.mrb[0].mxu0
        %v452 = vpop.f32.mrb[0].mxu0
        %v453 = vadd.f32 %v366, %v452
        %v454 = vpop.f32.mrb[0].mxu0
        %455 = vmatprep.mubr.bf16.mxu0 0
        %456 = vmatmul.mubr.bf16.gmra.mrb[0].mxu0 %v385
        %v457 = vpop.f32.mrb[0].mxu0
        %v458 = vadd.f32 %v366, %v457
        %v459 = vpop.f32.mrb[0].mxu0
        %v460 = vpop.f32.mrb[0].mxu0
        %v461 = vadd.f32 %v366, %v460
        %v462 = vpop.f32.mrb[0].mxu0
        %463 = vmatprep.mubr.bf16.mxu0 0
        %464 = vmatmul.mubr.bf16.gmra.mrb[0].mxu0 %v388
        %v465 = vpop.f32.mrb[0].mxu0
        %v466 = vadd.f32 %v366, %v465
        %v467 = vpop.f32.mrb[0].mxu0
        %v468 = vpop.f32.mrb[0].mxu0
        %v469 = vadd.f32 %v366, %v468
        %v470 = vpop.f32.mrb[0].mxu0
        %471 = vmatprep.mubr.bf16.mxu0 0
        %472 = vmatmul.mubr.bf16.gmra.mrb[0].mxu0 %v391
        %v473 = vpop.f32.mrb[0].mxu0
        %v474 = vadd.f32 %v366, %v473
        %v475 = vpop.f32.mrb[0].mxu0
        %v476 = vpop.f32.mrb[0].mxu0
        %v477 = vadd.f32 %v366, %v476
        %v478 = vpop.f32.mrb[0].mxu0
        %479 = vmatprep.mubr.bf16.mxu0 0
        %480 = vmatmul.mubr.bf16.gmra.mrb[0].mxu0 %v394
        %v481 = vpop.f32.mrb[0].mxu0
        %v482 = vadd.f32 %v366, %v481
        %v483 = vpop.f32.mrb[0].mxu0
        %v484 = vpop.f32.mrb[0].mxu0
        %v485 = vadd.f32 %v366, %v484
        %v486 = vpop.f32.mrb[0].mxu0
        %487 = vmatprep.mubr.bf16.mxu0 0
        %488 = vmatmul.mubr.bf16.gmra.mrb[0].mxu0 %v397
        %v489 = vpop.f32.mrb[0].mxu0
        %v490 = vadd.f32 %v366, %v489
        %v491 = vpop.f32.mrb[0].mxu0
        %v492 = vpop.f32.mrb[0].mxu0
        %v493 = vadd.f32 %v366, %v492
        %v494 = vpop.f32.mrb[0].mxu0
        %495 = vdwg.mxu0
        %v496 = vmax.f32 %v434, 0.0
        %v497 = vmax.f32 %v437, 0.0
        %v498 = vmax.f32 %v442, 0.0
        %v499 = vmax.f32 %v445, 0.0
        %v500 = vmax.f32 %v450, 0.0
        %v501 = vmax.f32 %v453, 0.0
        %v502 = vmax.f32 %v458, 0.0
        %v503 = vmax.f32 %v461, 0.0
        %v504 = vmax.f32 %v466, 0.0
        %v505 = vmax.f32 %v469, 0.0
        %v506 = vmax.f32 %v474, 0.0
        %v507 = vmax.f32 %v477, 0.0
        %v508 = vmax.f32 %v482, 0.0
        %v509 = vmax.f32 %v485, 0.0
        %v510 = vmax.f32 %v490, 0.0
        %v511 = vmax.f32 %v493, 0.0
        %v512 = vpack.c.bf16 %v497, %v496
        %v513 = vpack.c.bf16 %v499, %v498
        %v514 = vpack.c.bf16 %v501, %v500
        %v515 = vpack.c.bf16 %v503, %v502
        %v516 = vpack.c.bf16 %v505, %v504
        %v517 = vpack.c.bf16 %v507, %v506
        %v518 = vpack.c.bf16 %v509, %v508
        %v519 = vpack.c.bf16 %v511, %v510
        %v520 = vld [vmem:[%s3] sm:$0xf]
        %v521 = vld [vmem:[%s3 + $0x4] sm:$0xf]
        %v522 = vld [vmem:[%s3 + $0x8] sm:$0xf]
        %v523 = vld [vmem:[%s3 + $0xc] sm:$0xf]
        %v524 = vld [vmem:[%s3 + $0x10] sm:$0xf]
        %v525 = vld [vmem:[%s3 + $0x14] sm:$0xf]
        %v526 = vld [vmem:[%s3 + $0x18] sm:$0xf]
        %v527 = vld [vmem:[%s3 + $0x1c] sm:$0xf]
        %v528 = vld [vmem:[%s3 + $0x20] sm:$0xf]
        %v529 = vld [vmem:[%s3 + $0x24] sm:$0xf]
        %v530 = vld [vmem:[%s3 + $0x28] sm:$0xf]
        %v531 = vld [vmem:[%s3 + $0x2c] sm:$0xf]
        %v532 = vld [vmem:[%s3 + $0x30] sm:$0xf]
        %v533 = vld [vmem:[%s3 + $0x34] sm:$0xf]
        %v534 = vld [vmem:[%s3 + $0x38] sm:$0xf]
        %v535 = vld [vmem:[%s3 + $0x3c] sm:$0xf]
        %v536 = vld [vmem:[%s4] sm:$0x1]
        %v538 = vlaneseq
        %v539 = vshrl.u32 %v538, 7
        %v540 = vsub.s32 0, %v539
        %v541 = vrot.slane %v536, %v540
        %v559 = vunpack.c.l.b16 %v520
        %v560 = vunpack.c.l.b16 %v521
        %v561 = vunpack.c.l.b16 %v522
        %v562 = vunpack.c.l.b16 %v523
        %v563 = vunpack.c.l.b16 %v524
        %v564 = vunpack.c.l.b16 %v525
        %v565 = vunpack.c.l.b16 %v526
        %v566 = vunpack.c.l.b16 %v527
        %v567 = vunpack.c.l.b16 %v528
        %v568 = vunpack.c.l.b16 %v529
        %v569 = vunpack.c.l.b16 %v530
        %v570 = vunpack.c.l.b16 %v531
        %v571 = vunpack.c.l.b16 %v532
        %v572 = vunpack.c.l.b16 %v533
        %v573 = vunpack.c.l.b16 %v534
        %v574 = vunpack.c.l.b16 %v535
        %v575 = vpack.c.b16 %v560, %v559
        %v576 = vpack.c.b16 %v562, %v561
        %v577 = vpack.c.b16 %v564, %v563
        %v578 = vpack.c.b16 %v566, %v565
        %v579 = vpack.c.b16 %v568, %v567
        %v580 = vpack.c.b16 %v570, %v569
        %v581 = vpack.c.b16 %v572, %v571
        %v582 = vpack.c.b16 %v574, %v573
        %591 = vmatprep.subr.bf16.mxu0 0
        %592 = vmatpush1.bf16.msra.mxu0 %v575
        %593 = vmatprep.subr.bf16.mxu0 0
        %594 = vmatpush1.bf16.msra.mxu0 %v576
        %595 = vmatprep.subr.bf16.mxu0 0
        %596 = vmatpush1.bf16.msra.mxu0 %v577
        %597 = vmatprep.subr.bf16.mxu0 0
        %598 = vmatpush1.bf16.msra.mxu0 %v578
        %599 = vmatprep.subr.bf16.mxu0 0
        %600 = vmatpush1.bf16.msra.mxu0 %v579
        %601 = vmatprep.subr.bf16.mxu0 0
        %602 = vmatpush1.bf16.msra.mxu0 %v580
        %603 = vmatprep.subr.bf16.mxu0 0
        %604 = vmatpush1.bf16.msra.mxu0 %v581
        %605 = vmatprep.subr.bf16.mxu0 0
        %606 = vmatpush1.bf16.msra.mxu0 %v582
        %607 = vmatprep.subr.bf16.mxu0 0
        %608 = vmatpush1.bf16.msra.mxu0 0
        %609 = vmatprep.subr.bf16.mxu0 0
        %610 = vmatpush1.bf16.msra.mxu0 0
        %611 = vmatprep.subr.bf16.mxu0 0
        %612 = vmatpush1.bf16.msra.mxu0 0
        %613 = vmatprep.subr.bf16.mxu0 0
        %614 = vmatpush1.bf16.msra.mxu0 0
        %615 = vmatprep.subr.bf16.mxu0 0
        %616 = vmatpush1.bf16.msra.mxu0 0
        %617 = vmatprep.subr.bf16.mxu0 0
        %618 = vmatpush1.bf16.msra.mxu0 0
        %619 = vmatprep.subr.bf16.mxu0 0
        %620 = vmatpush1.bf16.msra.mxu0 0
        %621 = vmatprep.subr.bf16.mxu0 0
        %622 = vmatpush1.bf16.msra.mxu0 0
        %623 = vmatprep.mubr.bf16.mxu0 0
        %624 = vmatmul.mubr.bf16.gmra.mrb[0].mxu0 %v512
        %v625 = vpop.f32.mrb[0].mxu0
        %v626 = vadd.f32 %v541, %v625
        %v627 = vpop.f32.mrb[0].mxu0
        %v628 = vpop.f32.mrb[0].mxu0
        %v629 = vadd.f32 %v541, %v628
        %v630 = vpop.f32.mrb[0].mxu0
        %631 = vmatprep.mubr.bf16.mxu0 0
        %632 = vmatmul.mubr.bf16.gmra.mrb[0].mxu0 %v513
        %v633 = vpop.f32.mrb[0].mxu0
        %v634 = vadd.f32 %v541, %v633
        %v635 = vpop.f32.mrb[0].mxu0
        %v636 = vpop.f32.mrb[0].mxu0
        %v637 = vadd.f32 %v541, %v636
        %v638 = vpop.f32.mrb[0].mxu0
        %639 = vmatprep.mubr.bf16.mxu0 0
        %640 = vmatmul.mubr.bf16.gmra.mrb[0].mxu0 %v514
        %v641 = vpop.f32.mrb[0].mxu0
        %v642 = vadd.f32 %v541, %v641
        %v643 = vpop.f32.mrb[0].mxu0
        %v644 = vpop.f32.mrb[0].mxu0
        %v645 = vadd.f32 %v541, %v644
        %v646 = vpop.f32.mrb[0].mxu0
        %647 = vmatprep.mubr.bf16.mxu0 0
        %648 = vmatmul.mubr.bf16.gmra.mrb[0].mxu0 %v515
        %v649 = vpop.f32.mrb[0].mxu0
        %v650 = vadd.f32 %v541, %v649
        %v651 = vpop.f32.mrb[0].mxu0
        %v652 = vpop.f32.mrb[0].mxu0
        %v653 = vadd.f32 %v541, %v652
        %v654 = vpop.f32.mrb[0].mxu0
        %655 = vmatprep.mubr.bf16.mxu0 0
        %656 = vmatmul.mubr.bf16.gmra.mrb[0].mxu0 %v516
        %v657 = vpop.f32.mrb[0].mxu0
        %v658 = vadd.f32 %v541, %v657
        %v659 = vpop.f32.mrb[0].mxu0
        %v660 = vpop.f32.mrb[0].mxu0
        %v661 = vadd.f32 %v541, %v660
        %v662 = vpop.f32.mrb[0].mxu0
        %663 = vmatprep.mubr.bf16.mxu0 0
        %664 = vmatmul.mubr.bf16.gmra.mrb[0].mxu0 %v517
        %v665 = vpop.f32.mrb[0].mxu0
        %v666 = vadd.f32 %v541, %v665
        %v667 = vpop.f32.mrb[0].mxu0
        %v668 = vpop.f32.mrb[0].mxu0
        %v669 = vadd.f32 %v541, %v668
        %v670 = vpop.f32.mrb[0].mxu0
        %671 = vmatprep.mubr.bf16.mxu0 0
        %672 = vmatmul.mubr.bf16.gmra.mrb[0].mxu0 %v518
        %v673 = vpop.f32.mrb[0].mxu0
        %v674 = vadd.f32 %v541, %v673
        %v675 = vpop.f32.mrb[0].mxu0
        %v676 = vpop.f32.mrb[0].mxu0
        %v677 = vadd.f32 %v541, %v676
        %v678 = vpop.f32.mrb[0].mxu0
        %679 = vmatprep.mubr.bf16.mxu0 0
        %680 = vmatmul.mubr.bf16.gmra.mrb[0].mxu0 %v519
        %v681 = vpop.f32.mrb[0].mxu0
        %v682 = vadd.f32 %v541, %v681
        %v683 = vpop.f32.mrb[0].mxu0
        %v684 = vpop.f32.mrb[0].mxu0
        %v685 = vadd.f32 %v541, %v684
        %v686 = vpop.f32.mrb[0].mxu0
        %687 = vdwg.mxu0
        %v688 = vmax.f32 %v626, 0.0
        %v689 = vmax.f32 %v629, 0.0
        %v690 = vmax.f32 %v634, 0.0
        %v691 = vmax.f32 %v637, 0.0
        %v692 = vmax.f32 %v642, 0.0
        %v693 = vmax.f32 %v645, 0.0
        %v694 = vmax.f32 %v650, 0.0
        %v695 = vmax.f32 %v653, 0.0
        %v696 = vmax.f32 %v658, 0.0
        %v697 = vmax.f32 %v661, 0.0
        %v698 = vmax.f32 %v666, 0.0
        %v699 = vmax.f32 %v669, 0.0
        %v700 = vmax.f32 %v674, 0.0
        %v701 = vmax.f32 %v677, 0.0
        %v702 = vmax.f32 %v682, 0.0
        %v703 = vmax.f32 %v685, 0.0
        %v704 = vpack.c.bf16 %v689, %v688
        %v705 = vpack.c.bf16 %v691, %v690
        %v706 = vpack.c.bf16 %v693, %v692
        %v707 = vpack.c.bf16 %v695, %v694
        %v708 = vpack.c.bf16 %v697, %v696
        %v709 = vpack.c.bf16 %v699, %v698
        %v710 = vpack.c.bf16 %v701, %v700
        %v711 = vpack.c.bf16 %v703, %v702
        %v712 = vld [vmem:[%s5] sm:$0xf]
        %v713 = vld [vmem:[%s5 + $0x4] sm:$0xf]
        %v714 = vld [vmem:[%s5 + $0x8] sm:$0xf]
        %v715 = vld [vmem:[%s5 + $0xc] sm:$0xf]
        %v716 = vld [vmem:[%s5 + $0x10] sm:$0xf]
        %v717 = vld [vmem:[%s5 + $0x14] sm:$0xf]
        %v718 = vld [vmem:[%s5 + $0x18] sm:$0xf]
        %v719 = vld [vmem:[%s5 + $0x1c] sm:$0xf]
        %v720 = vld [vmem:[%s5 + $0x20] sm:$0xf]
        %v721 = vld [vmem:[%s5 + $0x24] sm:$0xf]
        %v722 = vld [vmem:[%s5 + $0x28] sm:$0xf]
        %v723 = vld [vmem:[%s5 + $0x2c] sm:$0xf]
        %v724 = vld [vmem:[%s5 + $0x30] sm:$0xf]
        %v725 = vld [vmem:[%s5 + $0x34] sm:$0xf]
        %v726 = vld [vmem:[%s5 + $0x38] sm:$0xf]
        %v727 = vld [vmem:[%s5 + $0x3c] sm:$0xf]
        %v728 = vld [vmem:[%s6] sm:$0x1]
        %v730 = vlaneseq
        %v731 = vshrl.u32 %v730, 7
        %v732 = vsub.s32 0, %v731
        %v733 = vrot.slane %v728, %v732
        %v751 = vunpack.c.l.b16 %v712
        %v752 = vunpack.c.l.b16 %v713
        %v753 = vunpack.c.l.b16 %v714
        %v754 = vunpack.c.l.b16 %v715
        %v755 = vunpack.c.l.b16 %v716
        %v756 = vunpack.c.l.b16 %v717
        %v757 = vunpack.c.l.b16 %v718
        %v758 = vunpack.c.l.b16 %v719
        %v759 = vunpack.c.l.b16 %v720
        %v760 = vunpack.c.l.b16 %v721
        %v761 = vunpack.c.l.b16 %v722
        %v762 = vunpack.c.l.b16 %v723
        %v763 = vunpack.c.l.b16 %v724
        %v764 = vunpack.c.l.b16 %v725
        %v765 = vunpack.c.l.b16 %v726
        %v766 = vunpack.c.l.b16 %v727
        %v767 = vpack.c.b16 %v752, %v751
        %v768 = vpack.c.b16 %v754, %v753
        %v769 = vpack.c.b16 %v756, %v755
        %v770 = vpack.c.b16 %v758, %v757
        %v771 = vpack.c.b16 %v760, %v759
        %v772 = vpack.c.b16 %v762, %v761
        %v773 = vpack.c.b16 %v764, %v763
        %v774 = vpack.c.b16 %v766, %v765
        %783 = vmatprep.subr.bf16.mxu0 0
        %784 = vmatpush1.bf16.msra.mxu0 %v767
        %785 = vmatprep.subr.bf16.mxu0 0
        %786 = vmatpush1.bf16.msra.mxu0 %v768
        %787 = vmatprep.subr.bf16.mxu0 0
        %788 = vmatpush1.bf16.msra.mxu0 %v769
        %789 = vmatprep.subr.bf16.mxu0 0
        %790 = vmatpush1.bf16.msra.mxu0 %v770
        %791 = vmatprep.subr.bf16.mxu0 0
        %792 = vmatpush1.bf16.msra.mxu0 %v771
        %793 = vmatprep.subr.bf16.mxu0 0
        %794 = vmatpush1.bf16.msra.mxu0 %v772
        %795 = vmatprep.subr.bf16.mxu0 0
        %796 = vmatpush1.bf16.msra.mxu0 %v773
        %797 = vmatprep.subr.bf16.mxu0 0
        %798 = vmatpush1.bf16.msra.mxu0 %v774
        %799 = vmatprep.subr.bf16.mxu0 0
        %800 = vmatpush1.bf16.msra.mxu0 0
        %801 = vmatprep.subr.bf16.mxu0 0
        %802 = vmatpush1.bf16.msra.mxu0 0
        %803 = vmatprep.subr.bf16.mxu0 0
        %804 = vmatpush1.bf16.msra.mxu0 0
        %805 = vmatprep.subr.bf16.mxu0 0
        %806 = vmatpush1.bf16.msra.mxu0 0
        %807 = vmatprep.subr.bf16.mxu0 0
        %808 = vmatpush1.bf16.msra.mxu0 0
        %809 = vmatprep.subr.bf16.mxu0 0
        %810 = vmatpush1.bf16.msra.mxu0 0
        %811 = vmatprep.subr.bf16.mxu0 0
        %812 = vmatpush1.bf16.msra.mxu0 0
        %813 = vmatprep.subr.bf16.mxu0 0
        %814 = vmatpush1.bf16.msra.mxu0 0
        %815 = vmatprep.mubr.bf16.mxu0 0
        %816 = vmatmul.mubr.bf16.gmra.mrb[0].mxu0 %v704
        %v817 = vpop.f32.mrb[0].mxu0
        %v818 = vadd.f32 %v733, %v817
        %v819 = vpop.f32.mrb[0].mxu0
        %v820 = vpop.f32.mrb[0].mxu0
        %v821 = vadd.f32 %v733, %v820
        %v822 = vpop.f32.mrb[0].mxu0
        %823 = vmatprep.mubr.bf16.mxu0 0
        %824 = vmatmul.mubr.bf16.gmra.mrb[0].mxu0 %v705
        %v825 = vpop.f32.mrb[0].mxu0
        %v826 = vadd.f32 %v733, %v825
        %v827 = vpop.f32.mrb[0].mxu0
        %v828 = vpop.f32.mrb[0].mxu0
        %v829 = vadd.f32 %v733, %v828
        %v830 = vpop.f32.mrb[0].mxu0
        %831 = vmatprep.mubr.bf16.mxu0 0
        %832 = vmatmul.mubr.bf16.gmra.mrb[0].mxu0 %v706
        %v833 = vpop.f32.mrb[0].mxu0
        %v834 = vadd.f32 %v733, %v833
        %v835 = vpop.f32.mrb[0].mxu0
        %v836 = vpop.f32.mrb[0].mxu0
        %v837 = vadd.f32 %v733, %v836
        %v838 = vpop.f32.mrb[0].mxu0
        %839 = vmatprep.mubr.bf16.mxu0 0
        %840 = vmatmul.mubr.bf16.gmra.mrb[0].mxu0 %v707
        %v841 = vpop.f32.mrb[0].mxu0
        %v842 = vadd.f32 %v733, %v841
        %v843 = vpop.f32.mrb[0].mxu0
        %v844 = vpop.f32.mrb[0].mxu0
        %v845 = vadd.f32 %v733, %v844
        %v846 = vpop.f32.mrb[0].mxu0
        %847 = vmatprep.mubr.bf16.mxu0 0
        %848 = vmatmul.mubr.bf16.gmra.mrb[0].mxu0 %v708
        %v849 = vpop.f32.mrb[0].mxu0
        %v850 = vadd.f32 %v733, %v849
        %v851 = vpop.f32.mrb[0].mxu0
        %v852 = vpop.f32.mrb[0].mxu0
        %v853 = vadd.f32 %v733, %v852
        %v854 = vpop.f32.mrb[0].mxu0
        %855 = vmatprep.mubr.bf16.mxu0 0
        %856 = vmatmul.mubr.bf16.gmra.mrb[0].mxu0 %v709
        %v857 = vpop.f32.mrb[0].mxu0
        %v858 = vadd.f32 %v733, %v857
        %v859 = vpop.f32.mrb[0].mxu0
        %v860 = vpop.f32.mrb[0].mxu0
        %v861 = vadd.f32 %v733, %v860
        %v862 = vpop.f32.mrb[0].mxu0
        %863 = vmatprep.mubr.bf16.mxu0 0
        %864 = vmatmul.mubr.bf16.gmra.mrb[0].mxu0 %v710
        %v865 = vpop.f32.mrb[0].mxu0
        %v866 = vadd.f32 %v733, %v865
        %v867 = vpop.f32.mrb[0].mxu0
        %v868 = vpop.f32.mrb[0].mxu0
        %v869 = vadd.f32 %v733, %v868
        %v870 = vpop.f32.mrb[0].mxu0
        %871 = vmatprep.mubr.bf16.mxu0 0
        %872 = vmatmul.mubr.bf16.gmra.mrb[0].mxu0 %v711
        %v873 = vpop.f32.mrb[0].mxu0
        %v874 = vadd.f32 %v733, %v873
        %v875 = vpop.f32.mrb[0].mxu0
        %v876 = vpop.f32.mrb[0].mxu0
        %v877 = vadd.f32 %v733, %v876
        %v878 = vpop.f32.mrb[0].mxu0
        %879 = vdwg.mxu0
        %v880 = vmax.f32 %v818, 0.0
        %v881 = vmax.f32 %v821, 0.0
        %v882 = vmax.f32 %v826, 0.0
        %v883 = vmax.f32 %v829, 0.0
        %v884 = vmax.f32 %v834, 0.0
        %v885 = vmax.f32 %v837, 0.0
        %v886 = vmax.f32 %v842, 0.0
        %v887 = vmax.f32 %v845, 0.0
        %v888 = vmax.f32 %v850, 0.0
        %v889 = vmax.f32 %v853, 0.0
        %v890 = vmax.f32 %v858, 0.0
        %v891 = vmax.f32 %v861, 0.0
        %v892 = vmax.f32 %v866, 0.0
        %v893 = vmax.f32 %v869, 0.0
        %v894 = vmax.f32 %v874, 0.0
        %v895 = vmax.f32 %v877, 0.0
        %v896 = vpack.c.bf16 %v881, %v880
        %v897 = vpack.c.bf16 %v883, %v882
        %v898 = vpack.c.bf16 %v885, %v884
        %v899 = vpack.c.bf16 %v887, %v886
        %v900 = vpack.c.bf16 %v889, %v888
        %v901 = vpack.c.bf16 %v891, %v890
        %v902 = vpack.c.bf16 %v893, %v892
        %v903 = vpack.c.bf16 %v895, %v894
        %v904 = vld [vmem:[%s7] sm:$0xf]
        %v905 = vld [vmem:[%s7 + $0x4] sm:$0xf]
        %v906 = vld [vmem:[%s7 + $0x8] sm:$0xf]
        %v907 = vld [vmem:[%s7 + $0xc] sm:$0xf]
        %v908 = vld [vmem:[%s7 + $0x10] sm:$0xf]
        %v909 = vld [vmem:[%s7 + $0x14] sm:$0xf]
        %v910 = vld [vmem:[%s7 + $0x18] sm:$0xf]
        %v911 = vld [vmem:[%s7 + $0x1c] sm:$0xf]
        %v912 = vld [vmem:[%s7 + $0x20] sm:$0xf]
        %v913 = vld [vmem:[%s7 + $0x24] sm:$0xf]
        %v914 = vld [vmem:[%s7 + $0x28] sm:$0xf]
        %v915 = vld [vmem:[%s7 + $0x2c] sm:$0xf]
        %v916 = vld [vmem:[%s7 + $0x30] sm:$0xf]
        %v917 = vld [vmem:[%s7 + $0x34] sm:$0xf]
        %v918 = vld [vmem:[%s7 + $0x38] sm:$0xf]
        %v919 = vld [vmem:[%s7 + $0x3c] sm:$0xf]
        %v920 = vld [vmem:[%s8] sm:$0x1]
        %v922 = vlaneseq
        %v923 = vshrl.u32 %v922, 7
        %v924 = vsub.s32 0, %v923
        %v925 = vrot.slane %v920, %v924
        %v943 = vunpack.c.l.b16 %v904
        %v944 = vunpack.c.l.b16 %v905
        %v945 = vunpack.c.l.b16 %v906
        %v946 = vunpack.c.l.b16 %v907
        %v947 = vunpack.c.l.b16 %v908
        %v948 = vunpack.c.l.b16 %v909
        %v949 = vunpack.c.l.b16 %v910
        %v950 = vunpack.c.l.b16 %v911
        %v951 = vunpack.c.l.b16 %v912
        %v952 = vunpack.c.l.b16 %v913
        %v953 = vunpack.c.l.b16 %v914
        %v954 = vunpack.c.l.b16 %v915
        %v955 = vunpack.c.l.b16 %v916
        %v956 = vunpack.c.l.b16 %v917
        %v957 = vunpack.c.l.b16 %v918
        %v958 = vunpack.c.l.b16 %v919
        %v959 = vpack.c.b16 %v944, %v943
        %v960 = vpack.c.b16 %v946, %v945
        %v961 = vpack.c.b16 %v948, %v947
        %v962 = vpack.c.b16 %v950, %v949
        %v963 = vpack.c.b16 %v952, %v951
        %v964 = vpack.c.b16 %v954, %v953
        %v965 = vpack.c.b16 %v956, %v955
        %v966 = vpack.c.b16 %v958, %v957
        %975 = vmatprep.subr.bf16.mxu0 0
        %976 = vmatpush1.bf16.msra.mxu0 %v959
        %977 = vmatprep.subr.bf16.mxu0 0
        %978 = vmatpush1.bf16.msra.mxu0 %v960
        %979 = vmatprep.subr.bf16.mxu0 0
        %980 = vmatpush1.bf16.msra.mxu0 %v961
        %981 = vmatprep.subr.bf16.mxu0 0
        %982 = vmatpush1.bf16.msra.mxu0 %v962
        %983 = vmatprep.subr.bf16.mxu0 0
        %984 = vmatpush1.bf16.msra.mxu0 %v963
        %985 = vmatprep.subr.bf16.mxu0 0
        %986 = vmatpush1.bf16.msra.mxu0 %v964
        %987 = vmatprep.subr.bf16.mxu0 0
        %988 = vmatpush1.bf16.msra.mxu0 %v965
        %989 = vmatprep.subr.bf16.mxu0 0
        %990 = vmatpush1.bf16.msra.mxu0 %v966
        %991 = vmatprep.subr.bf16.mxu0 0
        %992 = vmatpush1.bf16.msra.mxu0 0
        %993 = vmatprep.subr.bf16.mxu0 0
        %994 = vmatpush1.bf16.msra.mxu0 0
        %995 = vmatprep.subr.bf16.mxu0 0
        %996 = vmatpush1.bf16.msra.mxu0 0
        %997 = vmatprep.subr.bf16.mxu0 0
        %998 = vmatpush1.bf16.msra.mxu0 0
        %999 = vmatprep.subr.bf16.mxu0 0
        %1000 = vmatpush1.bf16.msra.mxu0 0
        %1001 = vmatprep.subr.bf16.mxu0 0
        %1002 = vmatpush1.bf16.msra.mxu0 0
        %1003 = vmatprep.subr.bf16.mxu0 0
        %1004 = vmatpush1.bf16.msra.mxu0 0
        %1005 = vmatprep.subr.bf16.mxu0 0
        %1006 = vmatpush1.bf16.msra.mxu0 0
        %1007 = vmatprep.mubr.bf16.mxu0 0
        %1008 = vmatmul.mubr.bf16.gmra.mrb[0].mxu0 %v896
        %v1009 = vpop.f32.mrb[0].mxu0
        %v1010 = vadd.f32 %v925, %v1009
        %v1011 = vpop.f32.mrb[0].mxu0
        %v1012 = vpop.f32.mrb[0].mxu0
        %v1013 = vadd.f32 %v925, %v1012
        %v1014 = vpop.f32.mrb[0].mxu0
        %1015 = vmatprep.mubr.bf16.mxu0 0
        %1016 = vmatmul.mubr.bf16.gmra.mrb[0].mxu0 %v897
        %v1017 = vpop.f32.mrb[0].mxu0
        %v1018 = vadd.f32 %v925, %v1017
        %v1019 = vpop.f32.mrb[0].mxu0
        %v1020 = vpop.f32.mrb[0].mxu0
        %v1021 = vadd.f32 %v925, %v1020
        %v1022 = vpop.f32.mrb[0].mxu0
        %1023 = vmatprep.mubr.bf16.mxu0 0
        %1024 = vmatmul.mubr.bf16.gmra.mrb[0].mxu0 %v898
        %v1025 = vpop.f32.mrb[0].mxu0
        %v1026 = vadd.f32 %v925, %v1025
        %v1027 = vpop.f32.mrb[0].mxu0
        %v1028 = vpop.f32.mrb[0].mxu0
        %v1029 = vadd.f32 %v925, %v1028
        %v1030 = vpop.f32.mrb[0].mxu0
        %1031 = vmatprep.mubr.bf16.mxu0 0
        %1032 = vmatmul.mubr.bf16.gmra.mrb[0].mxu0 %v899
        %v1033 = vpop.f32.mrb[0].mxu0
        %v1034 = vadd.f32 %v925, %v1033
        %v1035 = vpop.f32.mrb[0].mxu0
        %v1036 = vpop.f32.mrb[0].mxu0
        %v1037 = vadd.f32 %v925, %v1036
        %v1038 = vpop.f32.mrb[0].mxu0
        %1039 = vmatprep.mubr.bf16.mxu0 0
        %1040 = vmatmul.mubr.bf16.gmra.mrb[0].mxu0 %v900
        %v1041 = vpop.f32.mrb[0].mxu0
        %v1042 = vadd.f32 %v925, %v1041
        %v1043 = vpop.f32.mrb[0].mxu0
        %v1044 = vpop.f32.mrb[0].mxu0
        %v1045 = vadd.f32 %v925, %v1044
        %v1046 = vpop.f32.mrb[0].mxu0
        %1047 = vmatprep.mubr.bf16.mxu0 0
        %1048 = vmatmul.mubr.bf16.gmra.mrb[0].mxu0 %v901
        %v1049 = vpop.f32.mrb[0].mxu0
        %v1050 = vadd.f32 %v925, %v1049
        %v1051 = vpop.f32.mrb[0].mxu0
        %v1052 = vpop.f32.mrb[0].mxu0
        %v1053 = vadd.f32 %v925, %v1052
        %v1054 = vpop.f32.mrb[0].mxu0
        %1055 = vmatprep.mubr.bf16.mxu0 0
        %1056 = vmatmul.mubr.bf16.gmra.mrb[0].mxu0 %v902
        %v1057 = vpop.f32.mrb[0].mxu0
        %v1058 = vadd.f32 %v925, %v1057
        %v1059 = vpop.f32.mrb[0].mxu0
        %v1060 = vpop.f32.mrb[0].mxu0
        %v1061 = vadd.f32 %v925, %v1060
        %v1062 = vpop.f32.mrb[0].mxu0
        %1063 = vmatprep.mubr.bf16.mxu0 0
        %1064 = vmatmul.mubr.bf16.gmra.mrb[0].mxu0 %v903
        %v1065 = vpop.f32.mrb[0].mxu0
        %v1066 = vadd.f32 %v925, %v1065
        %v1067 = vpop.f32.mrb[0].mxu0
        %v1068 = vpop.f32.mrb[0].mxu0
        %v1069 = vadd.f32 %v925, %v1068
        %v1070 = vpop.f32.mrb[0].mxu0
        %1071 = vdwg.mxu0
        %1072 = vst [vmem:[%s326] sm:$0xff] %v1010
        %1073 = vst [vmem:[%s326 + $0x8] sm:$0xff] %v1013
        %1074 = vst [vmem:[%s326 + $0x10] sm:$0xff] %v1018
        %1075 = vst [vmem:[%s326 + $0x18] sm:$0xff] %v1021
        %1076 = vst [vmem:[%s326 + $0x20] sm:$0xff] %v1026
        %1077 = vst [vmem:[%s326 + $0x28] sm:$0xff] %v1029
        %1078 = vst [vmem:[%s326 + $0x30] sm:$0xff] %v1034
        %1079 = vst [vmem:[%s326 + $0x38] sm:$0xff] %v1037
        %1080 = vst [vmem:[%s326 + $0x40] sm:$0xff] %v1042
        %1081 = vst [vmem:[%s326 + $0x48] sm:$0xff] %v1045
        %1082 = vst [vmem:[%s326 + $0x50] sm:$0xff] %v1050
        %1083 = vst [vmem:[%s326 + $0x58] sm:$0xff] %v1053
        %1084 = vst [vmem:[%s326 + $0x60] sm:$0xff] %v1058
        %1085 = vst [vmem:[%s326 + $0x68] sm:$0xff] %v1061
        %1086 = vst [vmem:[%s326 + $0x70] sm:$0xff] %v1066
        %1087 = vst [vmem:[%s326 + $0x78] sm:$0xff] %v1069
        %s1088 = sand.u32 %s225, 1
        %s1089 = scalar_lea.sflag [#allocation3], %s1088
        %s1090 = sand.u32 %s225, 1
        %s1091 = smul.addr %s1090, 128
        %s1092 = scalar_lea.vmem [#allocation2], %s1091
        // Predicated region
        $region57: #{tpu_custom_call.1} parent=55 // pred_check
          %p1093 = pneg %p235
        $region58: #{tpu_custom_call.1} parent=55 // pred_check_branch
          %1095 = sbr.rel (%p1093) target = $region60
        $region59: #{tpu_custom_call.1} parent=55 // pred_region
          %s1096 = smul.u32 16, %s23
          %s1098 = ssub.s32 2048, 2048
          %1099 = vsyncadd %s1089, %s1098
          %s1100 = smul.addr %s1096, 128
          %s1101 = scalar_lea.hbm %s9, %s1100
          %s1102 = sshll.u32 %s1092, 4
          %s1103 = int_to_ptr.vmem [resolvable:$true] %s1102
          %1108 = dma.vmem_to_hbm [thread:$0]  %s1103, 2048, %s1101, %s1089, 128, 128, 8
        $region60: #{tpu_custom_call.1} parent=55 // pred_fallthru
          _
      $region56: #{tpu_custom_call.1} parent=5 // pred_fallthru
        _
      %p1109 = scmp.le.s32.totalorder 2, %s18
      // Predicated region
      $region61: #{tpu_custom_call.1} parent=5 // pred_check
        %p1110 = pneg %p1109
      $region62: #{tpu_custom_call.1} parent=5 // pred_check_branch
        %1112 = sbr.rel (%p1110) target = $region64
      $region63: #{tpu_custom_call.1} parent=5 // pred_region
        %s1113 = ssub.s32 %s18, 2
        // Predicated region
        $region65: #{tpu_custom_call.1} parent=63 // pred_check
          %p1114 = pneg %p241
        $region66: #{tpu_custom_call.1} parent=63 // pred_check_branch
          %1116 = sbr.rel (%p1114) target = $region68
        $region67: #{tpu_custom_call.1} parent=63 // pred_region
          %s1117 = sand.u32 %s226, 1
          %s1118 = scalar_lea.sflag [#allocation3], %s1117
          %s1119 = sand.u32 %s226, 1
          %s1120 = smul.addr %s1119, 128
          %s1121 = scalar_lea.vmem [#allocation2], %s1120
          %1122 = dma.done %s1118, 2048
        $region68: #{tpu_custom_call.1} parent=63 // pred_fallthru
          _
      $region64: #{tpu_custom_call.1} parent=5 // pred_fallthru
        _
    $region6: #{tpu_custom_call.1} parent=1 // loop_footer
      %s22 = sadd.s32 1, %s18
    $region7: #{tpu_custom_call.1} parent=1 // loop_footer_branch
      %17 = sbr.rel target = $region3
    $region8: #{tpu_custom_call.1} parent=1 // loop_exit
      _
    %1123 = vsyncpa [#allocation3], 1
    %s1124 = scalar_lea.sflag [#allocation3], 1
    %1125 = vsyncpa %s1124, 1

// kernel: tpu_custom_call.1
$region0: #{tpu_custom_call.1}
  #allocation0 [shape = 'u32[]', space=smem, size = 0x4, offset = 0x4, fixed_abs, tag = 'smem constant byte address 0x4 - core index']
  #allocation1 [shape = 'u32[144,128]{1,0:T(1,128)}', space=vmem, size = 0x12000, scoped, tag = 'internal scratch']
  %s0 = inlined_call_operand.vmem [shape: f32[256,16], index: 0, kind: input, shape index: {}]
  %s1 = inlined_call_operand.vmem [shape: bf16[16,128], index: 1, kind: input, shape index: {}]
  %s2 = inlined_call_operand.vmem [shape: f32[1,128], index: 2, kind: input, shape index: {}]
  %s3 = inlined_call_operand.vmem [shape: bf16[128,128], index: 3, kind: input, shape index: {}]
  %s4 = inlined_call_operand.vmem [shape: f32[1,128], index: 4, kind: input, shape index: {}]
  %s5 = inlined_call_operand.vmem [shape: bf16[128,128], index: 5, kind: input, shape index: {}]
  %s6 = inlined_call_operand.vmem [shape: f32[1,128], index: 6, kind: input, shape index: {}]
  %s7 = inlined_call_operand.vmem [shape: bf16[128,128], index: 7, kind: input, shape index: {}]
  %s8 = inlined_call_operand.vmem [shape: f32[1,128], index: 8, kind: input, shape index: {}]
  %s9 = inlined_call_operand.hbm [shape: f32[256,128], index: 9, kind: output, shape index: {}]
  %s10 = sld [smem:[#allocation0]]
  $region69: #{tpu_custom_call.1} parent=0
    _
  %s12 = ssub.s32 1, %s10
  %s13 = scalar_select 0, %s12, %s10
  $region1: #{tpu_custom_call.1} parent=0
    #allocation2 [shape = 'u8[131072]{0}', space=vmem, size = 0x20000, scoped, tag = 'output window, operand 0']
    #allocation3 [shape = 's32[2]{0}', space=sflag, size = 0x8, scoped, tag = 'scoped memory for tpu_custom_call.1']
    %14 = vsyncpa [#allocation3], 0
    %s15 = scalar_lea.sflag [#allocation3], 1
    %16 = vsyncpa %s15, 0
    loop: start=0, step=1, limit=4
    $region2: #{tpu_custom_call.1} parent=1 // loop_pre_header
      _
    $region3: #{tpu_custom_call.1} parent=1 // loop_header
      %s18 = sphi 0, %s22
      %p19 = scmp.ge.s32.totalorder %s18, 4
      %s28 = sphi 0, %s30
      %s31 = sphi 0, %s28
      %s32 = sphi 0, %s31
      %s48 = sphi 0, %s32
      %s52 = sphi 0, %s52
      %s54 = sphi 0, %s52
      %s55 = sphi 0, %s54
      %s69 = sphi 0, %s55
      %s73 = sphi 0, %s73
      %s75 = sphi 0, %s73
      %s76 = sphi 0, %s75
      %s90 = sphi 0, %s76
      %s94 = sphi 0, %s94
      %s96 = sphi 0, %s94
      %s97 = sphi 0, %s96
      %s111 = sphi 0, %s97
      %s115 = sphi 0, %s115
      %s117 = sphi 0, %s115
      %s118 = sphi 0, %s117
      %s132 = sphi 0, %s118
      %s136 = sphi 0, %s136
      %s138 = sphi 0, %s136
      %s139 = sphi 0, %s138
      %s153 = sphi 0, %s139
      %s157 = sphi 0, %s157
      %s159 = sphi 0, %s157
      %s160 = sphi 0, %s159
      %s174 = sphi 0, %s160
      %s178 = sphi 0, %s178
      %s180 = sphi 0, %s178
      %s181 = sphi 0, %s180
      %s195 = sphi 0, %s181
      %s199 = sphi 0, %s199
      %s201 = sphi 0, %s199
      %s202 = sphi 0, %s201
      %s216 = sphi 0, %s202
      %s222 = sphi 0, %s224
      %s225 = sphi 0, %s222
      %s226 = sphi 0, %s225
      %s242 = sphi 0, %s226
    $region4: #{tpu_custom_call.1} parent=1 // loop_header_branch
      %21 = sbr.rel (%p19) target = $region8
    $region5: #{tpu_custom_call.1} parent=1 // loop_body
      %s23 = ssub.s32 %s18, 1
      %s24 = ssub.s32 %s18, 2
      %s25 = sadd.s32 %s18, 1
      %s26 = ssub.s32 %s18, %s25
      %p27 = scmp.eq.s32.totalorder %s26, 0
      %s29 = sadd.s32 %s28, 1
      %s30 = scalar_select %p27, %s28, %s29
      %p33 = pneg %p27
      %p34 = scmp.eq.s32.totalorder %s18, 1
      %p35 = por %p33, %p34
      %p36 = scmp.ne.s32.totalorder %s28, %s31
      %p37 = scmp.eq.s32.totalorder %s18, 0
      %p38 = por %p36, %p37
      %p39 = scmp.ne.s32.totalorder %s28, %s31
      %p40 = scmp.eq.s32.totalorder %s23, 1
      %p41 = por %p39, %p40
      %p42 = scmp.ne.s32.totalorder %s31, %s32
      %p43 = scmp.eq.s32.totalorder %s23, 0
      %p44 = por %p42, %p43
      %p45 = scmp.ne.s32.totalorder %s31, %s32
      %p46 = scmp.eq.s32.totalorder %s24, 1
      %p47 = por %p45, %p46
      %p49 = scmp.ne.s32.totalorder %s32, %s48
      %p50 = scmp.eq.s32.totalorder %s24, 0
      %p51 = por %p49, %p50
      %s53 = sadd.s32 %s52, 1
      %p56 = scmp.eq.s32.totalorder %s18, 1
      %p57 = scmp.ne.s32.totalorder %s52, %s54
      %p58 = scmp.eq.s32.totalorder %s18, 0
      %p59 = por %p57, %p58
      %p60 = scmp.ne.s32.totalorder %s52, %s54
      %p61 = scmp.eq.s32.totalorder %s23, 1
      %p62 = por %p60, %p61
      %p63 = scmp.ne.s32.totalorder %s54, %s55
      %p64 = scmp.eq.s32.totalorder %s23, 0
      %p65 = por %p63, %p64
      %p66 = scmp.ne.s32.totalorder %s54, %s55
      %p67 = scmp.eq.s32.totalorder %s24, 1
      %p68 = por %p66, %p67
      %p70 = scmp.ne.s32.totalorder %s55, %s69
      %p71 = scmp.eq.s32.totalorder %s24, 0
      %p72 = por %p70, %p71
      %s74 = sadd.s32 %s73, 1
      %p77 = scmp.eq.s32.totalorder %s18, 1
      %p78 = scmp.ne.s32.totalorder %s73, %s75
      %p79 = scmp.eq.s32.totalorder %s18, 0
      %p80 = por %p78, %p79
      %p81 = scmp.ne.s32.totalorder %s73, %s75
      %p82 = scmp.eq.s32.totalorder %s23, 1
      %p83 = por %p81, %p82
      %p84 = scmp.ne.s32.totalorder %s75, %s76
      %p85 = scmp.eq.s32.totalorder %s23, 0
      %p86 = por %p84, %p85
      %p87 = scmp.ne.s32.totalorder %s75, %s76
      %p88 = scmp.eq.s32.totalorder %s24, 1
      %p89 = por %p87, %p88
      %p91 = scmp.ne.s32.totalorder %s76, %s90
      %p92 = scmp.eq.s32.totalorder %s24, 0
      %p93 = por %p91, %p92
      %s95 = sadd.s32 %s94, 1
      %p98 = scmp.eq.s32.totalorder %s18, 1
      %p99 = scmp.ne.s32.totalorder %s94, %s96
      %p100 = scmp.eq.s32.totalorder %s18, 0
      %p101 = por %p99, %p100
      %p102 = scmp.ne.s32.totalorder %s94, %s96
      %p103 = scmp.eq.s32.totalorder %s23, 1
      %p104 = por %p102, %p103
      %p105 = scmp.ne.s32.totalorder %s96, %s97
      %p106 = scmp.eq.s32.totalorder %s23, 0
      %p107 = por %p105, %p106
      %p108 = scmp.ne.s32.totalorder %s96, %s97
      %p109 = scmp.eq.s32.totalorder %s24, 1
      %p110 = por %p108, %p109
      %p112 = scmp.ne.s32.totalorder %s97, %s111
      %p113 = scmp.eq.s32.totalorder %s24, 0
      %p114 = por %p112, %p113
      %s116 = sadd.s32 %s115, 1
      %p119 = scmp.eq.s32.totalorder %s18, 1
      %p120 = scmp.ne.s32.totalorder %s115, %s117
      %p121 = scmp.eq.s32.totalorder %s18, 0
      %p122 = por %p120, %p121
      %p123 = scmp.ne.s32.totalorder %s115, %s117
      %p124 = scmp.eq.s32.totalorder %s23, 1
      %p125 = por %p123, %p124
      %p126 = scmp.ne.s32.totalorder %s117, %s118
      %p127 = scmp.eq.s32.totalorder %s23, 0
      %p128 = por %p126, %p127
      %p129 = scmp.ne.s32.totalorder %s117, %s118
      %p130 = scmp.eq.s32.totalorder %s24, 1
      %p131 = por %p129, %p130
      %p133 = scmp.ne.s32.totalorder %s118, %s132
      %p134 = scmp.eq.s32.totalorder %s24, 0
      %p135 = por %p133, %p134
      %s137 = sadd.s32 %s136, 1
      %p140 = scmp.eq.s32.totalorder %s18, 1
      %p141 = scmp.ne.s32.totalorder %s136, %s138
      %p142 = scmp.eq.s32.totalorder %s18, 0
      %p143 = por %p141, %p142
      %p144 = scmp.ne.s32.totalorder %s136, %s138
      %p145 = scmp.eq.s32.totalorder %s23, 1
      %p146 = por %p144, %p145
      %p147 = scmp.ne.s32.totalorder %s138, %s139
      %p148 = scmp.eq.s32.totalorder %s23, 0
      %p149 = por %p147, %p148
      %p150 = scmp.ne.s32.totalorder %s138, %s139
      %p151 = scmp.eq.s32.totalorder %s24, 1
      %p152 = por %p150, %p151
      %p154 = scmp.ne.s32.totalorder %s139, %s153
      %p155 = scmp.eq.s32.totalorder %s24, 0
      %p156 = por %p154, %p155
      %s158 = sadd.s32 %s157, 1
      %p161 = scmp.eq.s32.totalorder %s18, 1
      %p162 = scmp.ne.s32.totalorder %s157, %s159
      %p163 = scmp.eq.s32.totalorder %s18, 0
      %p164 = por %p162, %p163
      %p165 = scmp.ne.s32.totalorder %s157, %s159
      %p166 = scmp.eq.s32.totalorder %s23, 1
      %p167 = por %p165, %p166
      %p168 = scmp.ne.s32.totalorder %s159, %s160
      %p169 = scmp.eq.s32.totalorder %s23, 0
      %p170 = por %p168, %p169
      %p171 = scmp.ne.s32.totalorder %s159, %s160
      %p172 = scmp.eq.s32.totalorder %s24, 1
      %p173 = por %p171, %p172
      %p175 = scmp.ne.s32.totalorder %s160, %s174
      %p176 = scmp.eq.s32.totalorder %s24, 0
      %p177 = por %p175, %p176
      %s179 = sadd.s32 %s178, 1
      %p182 = scmp.eq.s32.totalorder %s18, 1
      %p183 = scmp.ne.s32.totalorder %s178, %s180
      %p184 = scmp.eq.s32.totalorder %s18, 0
      %p185 = por %p183, %p184
      %p186 = scmp.ne.s32.totalorder %s178, %s180
      %p187 = scmp.eq.s32.totalorder %s23, 1
      %p188 = por %p186, %p187
      %p189 = scmp.ne.s32.totalorder %s180, %s181
      %p190 = scmp.eq.s32.totalorder %s23, 0
      %p191 = por %p189, %p190
      %p192 = scmp.ne.s32.totalorder %s180, %s181
      %p193 = scmp.eq.s32.totalorder %s24, 1
      %p194 = por %p192, %p193
      %p196 = scmp.ne.s32.totalorder %s181, %s195
      %p197 = scmp.eq.s32.totalorder %s24, 0
      %p198 = por %p196, %p197
      %s200 = sadd.s32 %s199, 1
      %p203 = scmp.eq.s32.totalorder %s18, 1
      %p204 = scmp.ne.s32.totalorder %s199, %s201
      %p205 = scmp.eq.s32.totalorder %s18, 0
      %p206 = por %p204, %p205
      %p207 = scmp.ne.s32.totalorder %s199, %s201
      %p208 = scmp.eq.s32.totalorder %s23, 1
      %p209 = por %p207, %p208
      %p210 = scmp.ne.s32.totalorder %s201, %s202
      %p211 = scmp.eq.s32.totalorder %s23, 0
      %p212 = por %p210, %p211
      %p213 = scmp.ne.s32.totalorder %s201, %s202
      %p214 = scmp.eq.s32.totalorder %s24, 1
      %p215 = por %p213, %p214
      %p217 = scmp.ne.s32.totalorder %s202, %s216
      %p218 = scmp.eq.s32.totalorder %s24, 0
      %p219 = por %p217, %p218
      %s220 = ssub.s32 %s18, %s25
      %p221 = scmp.eq.s32.totalorder %s220, 0
      %s223 = sadd.s32 %s222, 1
      %s224 = scalar_select %p221, %s222, %s223
      %p227 = pneg %p221
      %p228 = scmp.eq.s32.totalorder %s18, 1
      %p229 = por %p227, %p228
      %p230 = scmp.ne.s32.totalorder %s222, %s225
      %p231 = scmp.eq.s32.totalorder %s18, 0
      %p232 = por %p230, %p231
      %p233 = scmp.ne.s32.totalorder %s222, %s225
      %p234 = scmp.eq.s32.totalorder %s23, 1
      %p235 = por %p233, %p234
      %p236 = scmp.ne.s32.totalorder %s225, %s226
      %p237 = scmp.eq.s32.totalorder %s23, 0
      %p238 = por %p236, %p237
      %p239 = scmp.ne.s32.totalorder %s225, %s226
      %p240 = scmp.eq.s32.totalorder %s24, 1
      %p241 = por %p239, %p240
      %p243 = scmp.ne.s32.totalorder %s226, %s242
      %p244 = scmp.eq.s32.totalorder %s24, 0
      %p245 = por %p243, %p244
      %p246 = scmp.le.s32.totalorder 1, %s18
      %p247 = scmp.lt.s32.totalorder %s18, 3
      %p248 = pnand %p246, %p247
      %p249 = pneg %p248
      // Predicated region
      $region9: #{tpu_custom_call.1} parent=5 // pred_check
        _
      $region10: #{tpu_custom_call.1} parent=5 // pred_check_branch
        %251 = sbr.rel (%p248) target = $region12
      $region11: #{tpu_custom_call.1} parent=5 // pred_region
        %s252 = ssub.s32 %s18, 1
        // Predicated region
        $region13: #{tpu_custom_call.1} parent=11 // pred_check
          %p253 = pneg %p65
        $region14: #{tpu_custom_call.1} parent=11 // pred_check_branch
          %255 = sbr.rel (%p253) target = $region16
        $region15: #{tpu_custom_call.1} parent=11 // pred_region
          _
        $region16: #{tpu_custom_call.1} parent=11 // pred_fallthru
          _
        // Predicated region
        $region17: #{tpu_custom_call.1} parent=11 // pred_check
          %p256 = pneg %p86
        $region18: #{tpu_custom_call.1} parent=11 // pred_check_branch
          %258 = sbr.rel (%p256) target = $region20
        $region19: #{tpu_custom_call.1} parent=11 // pred_region
          _
        $region20: #{tpu_custom_call.1} parent=11 // pred_fallthru
          _
        // Predicated region
        $region21: #{tpu_custom_call.1} parent=11 // pred_check
          %p259 = pneg %p107
        $region22: #{tpu_custom_call.1} parent=11 // pred_check_branch
          %261 = sbr.rel (%p259) target = $region24
        $region23: #{tpu_custom_call.1} parent=11 // pred_region
          _
        $region24: #{tpu_custom_call.1} parent=11 // pred_fallthru
          _
        // Predicated region
        $region25: #{tpu_custom_call.1} parent=11 // pred_check
          %p262 = pneg %p128
        $region26: #{tpu_custom_call.1} parent=11 // pred_check_branch
          %264 = sbr.rel (%p262) target = $region28
        $region27: #{tpu_custom_call.1} parent=11 // pred_region
          _
        $region28: #{tpu_custom_call.1} parent=11 // pred_fallthru
          _
        // Predicated region
        $region29: #{tpu_custom_call.1} parent=11 // pred_check
          %p265 = pneg %p149
        $region30: #{tpu_custom_call.1} parent=11 // pred_check_branch
          %267 = sbr.rel (%p265) target = $region32
        $region31: #{tpu_custom_call.1} parent=11 // pred_region
          _
        $region32: #{tpu_custom_call.1} parent=11 // pred_fallthru
          _
        // Predicated region
        $region33: #{tpu_custom_call.1} parent=11 // pred_check
          %p268 = pneg %p170
        $region34: #{tpu_custom_call.1} parent=11 // pred_check_branch
          %270 = sbr.rel (%p268) target = $region36
        $region35: #{tpu_custom_call.1} parent=11 // pred_region
          _
        $region36: #{tpu_custom_call.1} parent=11 // pred_fallthru
          _
        // Predicated region
        $region37: #{tpu_custom_call.1} parent=11 // pred_check
          %p271 = pneg %p191
        $region38: #{tpu_custom_call.1} parent=11 // pred_check_branch
          %273 = sbr.rel (%p271) target = $region40
        $region39: #{tpu_custom_call.1} parent=11 // pred_region
          _
        $region40: #{tpu_custom_call.1} parent=11 // pred_fallthru
          _
        // Predicated region
        $region41: #{tpu_custom_call.1} parent=11 // pred_check
          %p274 = pneg %p212
        $region42: #{tpu_custom_call.1} parent=11 // pred_check_branch
          %276 = sbr.rel (%p274) target = $region44
        $region43: #{tpu_custom_call.1} parent=11 // pred_region
          _
        $region44: #{tpu_custom_call.1} parent=11 // pred_fallthru
          _
      $region12: #{tpu_custom_call.1} parent=5 // pred_fallthru
        _
      %p277 = scmp.lt.s32.totalorder %s18, 2
      // Predicated region
      $region45: #{tpu_custom_call.1} parent=5 // pred_check
        %p278 = pneg %p277
      $region46: #{tpu_custom_call.1} parent=5 // pred_check_branch
        %280 = sbr.rel (%p278) target = $region48
      $region47: #{tpu_custom_call.1} parent=5 // pred_region
        // Predicated region
        $region49: #{tpu_custom_call.1} parent=47 // pred_check
          %p281 = pneg %p38
        $region50: #{tpu_custom_call.1} parent=47 // pred_check_branch
          %283 = sbr.rel (%p281) target = $region52
        $region51: #{tpu_custom_call.1} parent=47 // pred_region
          %s284 = smul.u32 16, %s18
          %p285 = scmp.lt.s32.totalorder %s284, 31
          %s286 = scalar_select %p285, %s284, 31
          %s287 = smul.addr %s286, 8
          %s288 = scalar_lea.vmem %s0, %s287
          %s289 = smul.u32 16, %s18
        $region52: #{tpu_custom_call.1} parent=47 // pred_fallthru
          _
      $region48: #{tpu_custom_call.1} parent=5 // pred_fallthru
        _
      %p290 = scmp.le.s32.totalorder 1, %s18
      %p291 = scmp.lt.s32.totalorder %s18, 3
      %p292 = pnand %p290, %p291
      %p293 = pneg %p292
      // Predicated region
      $region53: #{tpu_custom_call.1} parent=5 // pred_check
        _
      $region54: #{tpu_custom_call.1} parent=5 // pred_check_branch
        %295 = sbr.rel (%p292) target = $region56
      $region55: #{tpu_custom_call.1} parent=5 // pred_region
        %s296 = ssub.s32 %s18, 1
        %s297 = smul.u32 16, %s23
        %p298 = scmp.lt.s32.totalorder %s297, 31
        %s299 = scalar_select %p298, %s297, 31
        %s300 = smul.addr %s299, 8
        %s301 = scalar_lea.vmem %s0, %s300
        %p302 = pneg %p44
        %p303 = pneg %p41
        %p304 = pneg %p65
        %p305 = pneg %p62
        %p306 = pneg %p86
        %p307 = pneg %p83
        %p308 = pneg %p107
        %p309 = pneg %p104
        %p310 = pneg %p128
        %p311 = pneg %p125
        %p312 = pneg %p149
        %p313 = pneg %p146
        %p314 = pneg %p170
        %p315 = pneg %p167
        %p316 = pneg %p191
        %p317 = pneg %p188
        %p318 = pneg %p212
        %p319 = pneg %p209
        %p320 = pneg %p238
        %p321 = pneg %p235
        %s322 = sand.u32 %s225, 1
        %s323 = scalar_lea.sflag [#allocation3], %s322
        %s324 = sand.u32 %s225, 1
        %s325 = smul.addr %s324, 128
        %s326 = scalar_lea.vmem [#allocation2], %s325
        %s327 = smul.u32 16, %s23
        %p328 = scmp.lt.s32.totalorder %s327, 31
        %s329 = scalar_select %p328, %s327, 31
        %s330 = smul.addr %s329, 8
        %s331 = scalar_lea.vmem %s0, %s330
        %s332 = smul.u32 16, %s23
        %s333 = smul.u32 16, %s23
        %v335 = vld [vmem:[%s331] sm:$0xff]
        %v336 = vld [vmem:[%s331 + $0x8] sm:$0xff]
        %v337 = vld [vmem:[%s331 + $0x10] sm:$0xff]
        %v338 = vld [vmem:[%s331 + $0x18] sm:$0xff]
        %v339 = vld [vmem:[%s331 + $0x20] sm:$0xff]
        %v340 = vld [vmem:[%s331 + $0x28] sm:$0xff]
        %v341 = vld [vmem:[%s331 + $0x30] sm:$0xff]
        %v342 = vld [vmem:[%s331 + $0x38] sm:$0xff]
        %v343 = vld [vmem:[%s331 + $0x40] sm:$0xff]
        %v344 = vld [vmem:[%s331 + $0x48] sm:$0xff]
        %v345 = vld [vmem:[%s331 + $0x50] sm:$0xff]
        %v346 = vld [vmem:[%s331 + $0x58] sm:$0xff]
        %v347 = vld [vmem:[%s331 + $0x60] sm:$0xff]
        %v348 = vld [vmem:[%s331 + $0x68] sm:$0xff]
        %v349 = vld [vmem:[%s331 + $0x70] sm:$0xff]
        %v350 = vld [vmem:[%s331 + $0x78] sm:$0xff]
        %v351 = vpack.c.bf16 %v336, %v335
        %v352 = vpack.c.bf16 %v338, %v337
        %v353 = vpack.c.bf16 %v340, %v339
        %v354 = vpack.c.bf16 %v342, %v341
        %v355 = vpack.c.bf16 %v344, %v343
        %v356 = vpack.c.bf16 %v346, %v345
        %v357 = vpack.c.bf16 %v348, %v347
        %v358 = vpack.c.bf16 %v350, %v349
        %v359 = vld [vmem:[%s1] sm:$0xf]
        %v360 = vld [vmem:[%s1 + $0x4] sm:$0xf]
        %v361 = vld [vmem:[%s2] sm:$0x1]
        %v363 = vlaneseq
        %v364 = vshrl.u32 %v363, 7
        %v365 = vsub.s32 0, %v364
        %v366 = vrot.slane %v361, %v365
        %v370 = vunpack.c.l.b16 %v359
        %v371 = vunpack.c.l.b16 %v360
        %v372 = vpack.c.b16 %v371, %v370
        %vm374 = vcmask 130048
        %v376 = vsel %vm374, %v351, 0
        %v379 = vsel %vm374, %v352, 0
        %v382 = vsel %vm374, %v353, 0
        %v385 = vsel %vm374, %v354, 0
        %v388 = vsel %vm374, %v355, 0
        %v391 = vsel %vm374, %v356, 0
        %v394 = vsel %vm374, %v357, 0
        %v397 = vsel %vm374, %v358, 0
        %399 = vmatprep.subr.bf16.mxu0 0
        %400 = vmatpush1.bf16.msra.mxu0 %v372
        %401 = vmatprep.subr.bf16.mxu0 0
        %402 = vmatpush1.bf16.msra.mxu0 0
        %403 = vmatprep.subr.bf16.mxu0 0
        %404 = vmatpush1.bf16.msra.mxu0 0
        %405 = vmatprep.subr.bf16.mxu0 0
        %406 = vmatpush1.bf16.msra.mxu0 0
        %407 = vmatprep.subr.bf16.mxu0 0
        %408 = vmatpush1.bf16.msra.mxu0 0
        %409 = vmatprep.subr.bf16.mxu0 0
        %410 = vmatpush1.bf16.msra.mxu0 0
        %411 = vmatprep.subr.bf16.mxu0 0
        %412 = vmatpush1.bf16.msra.mxu0 0
        %413 = vmatprep.subr.bf16.mxu0 0
        %414 = vmatpush1.bf16.msra.mxu0 0
        %415 = vmatprep.subr.bf16.mxu0 0
        %416 = vmatpush1.bf16.msra.mxu0 0
        %417 = vmatprep.subr.bf16.mxu0 0
        %418 = vmatpush1.bf16.msra.mxu0 0
        %419 = vmatprep.subr.bf16.mxu0 0
        %420 = vmatpush1.bf16.msra.mxu0 0
        %421 = vmatprep.subr.bf16.mxu0 0
        %422 = vmatpush1.bf16.msra.mxu0 0
        %423 = vmatprep.subr.bf16.mxu0 0
        %424 = vmatpush1.bf16.msra.mxu0 0
        %425 = vmatprep.subr.bf16.mxu0 0
        %426 = vmatpush1.bf16.msra.mxu0 0
        %427 = vmatprep.subr.bf16.mxu0 0
        %428 = vmatpush1.bf16.msra.mxu0 0
        %429 = vmatprep.subr.bf16.mxu0 0
        %430 = vmatpush1.bf16.msra.mxu0 0
        %431 = vmatprep.mubr.bf16.mxu0 0
        %432 = vmatmul.mubr.bf16.gmra.mrb[0].mxu0 %v376
        %v433 = vpop.f32.mrb[0].mxu0
        %v434 = vadd.f32 %v366, %v433
        %v435 = vpop.f32.mrb[0].mxu0
        %v436 = vpop.f32.mrb[0].mxu0
        %v437 = vadd.f32 %v366, %v436
        %v438 = vpop.f32.mrb[0].mxu0
        %439 = vmatprep.mubr.bf16.mxu0 0
        %440 = vmatmul.mubr.bf16.gmra.mrb[0].mxu0 %v379
        %v441 = vpop.f32.mrb[0].mxu0
        %v442 = vadd.f32 %v366, %v441
        %v443 = vpop.f32.mrb[0].mxu0
        %v444 = vpop.f32.mrb[0].mxu0
        %v445 = vadd.f32 %v366, %v444
        %v446 = vpop.f32.mrb[0].mxu0
        %447 = vmatprep.mubr.bf16.mxu0 0
        %448 = vmatmul.mubr.bf16.gmra.mrb[0].mxu0 %v382
        %v449 = vpop.f32.mrb[0].mxu0
        %v450 = vadd.f32 %v366, %v449
        %v451 = vpop.f32.mrb[0].mxu0
        %v452 = vpop.f32.mrb[0].mxu0
        %v453 = vadd.f32 %v366, %v452
        %v454 = vpop.f32.mrb[0].mxu0
        %455 = vmatprep.mubr.bf16.mxu0 0
        %456 = vmatmul.mubr.bf16.gmra.mrb[0].mxu0 %v385
        %v457 = vpop.f32.mrb[0].mxu0
        %v458 = vadd.f32 %v366, %v457
        %v459 = vpop.f32.mrb[0].mxu0
        %v460 = vpop.f32.mrb[0].mxu0
        %v461 = vadd.f32 %v366, %v460
        %v462 = vpop.f32.mrb[0].mxu0
        %463 = vmatprep.mubr.bf16.mxu0 0
        %464 = vmatmul.mubr.bf16.gmra.mrb[0].mxu0 %v388
        %v465 = vpop.f32.mrb[0].mxu0
        %v466 = vadd.f32 %v366, %v465
        %v467 = vpop.f32.mrb[0].mxu0
        %v468 = vpop.f32.mrb[0].mxu0
        %v469 = vadd.f32 %v366, %v468
        %v470 = vpop.f32.mrb[0].mxu0
        %471 = vmatprep.mubr.bf16.mxu0 0
        %472 = vmatmul.mubr.bf16.gmra.mrb[0].mxu0 %v391
        %v473 = vpop.f32.mrb[0].mxu0
        %v474 = vadd.f32 %v366, %v473
        %v475 = vpop.f32.mrb[0].mxu0
        %v476 = vpop.f32.mrb[0].mxu0
        %v477 = vadd.f32 %v366, %v476
        %v478 = vpop.f32.mrb[0].mxu0
        %479 = vmatprep.mubr.bf16.mxu0 0
        %480 = vmatmul.mubr.bf16.gmra.mrb[0].mxu0 %v394
        %v481 = vpop.f32.mrb[0].mxu0
        %v482 = vadd.f32 %v366, %v481
        %v483 = vpop.f32.mrb[0].mxu0
        %v484 = vpop.f32.mrb[0].mxu0
        %v485 = vadd.f32 %v366, %v484
        %v486 = vpop.f32.mrb[0].mxu0
        %487 = vmatprep.mubr.bf16.mxu0 0
        %488 = vmatmul.mubr.bf16.gmra.mrb[0].mxu0 %v397
        %v489 = vpop.f32.mrb[0].mxu0
        %v490 = vadd.f32 %v366, %v489
        %v491 = vpop.f32.mrb[0].mxu0
        %v492 = vpop.f32.mrb[0].mxu0
        %v493 = vadd.f32 %v366, %v492
        %v494 = vpop.f32.mrb[0].mxu0
        %495 = vdwg.mxu0
        %v496 = vmax.f32 %v434, 0.0
        %v497 = vmax.f32 %v437, 0.0
        %v498 = vmax.f32 %v442, 0.0
        %v499 = vmax.f32 %v445, 0.0
        %v500 = vmax.f32 %v450, 0.0
        %v501 = vmax.f32 %v453, 0.0
        %v502 = vmax.f32 %v458, 0.0
        %v503 = vmax.f32 %v461, 0.0
        %v504 = vmax.f32 %v466, 0.0
        %v505 = vmax.f32 %v469, 0.0
        %v506 = vmax.f32 %v474, 0.0
        %v507 = vmax.f32 %v477, 0.0
        %v508 = vmax.f32 %v482, 0.0
        %v509 = vmax.f32 %v485, 0.0
        %v510 = vmax.f32 %v490, 0.0
        %v511 = vmax.f32 %v493, 0.0
        %v512 = vpack.c.bf16 %v497, %v496
        %v513 = vpack.c.bf16 %v499, %v498
        %v514 = vpack.c.bf16 %v501, %v500
        %v515 = vpack.c.bf16 %v503, %v502
        %v516 = vpack.c.bf16 %v505, %v504
        %v517 = vpack.c.bf16 %v507, %v506
        %v518 = vpack.c.bf16 %v509, %v508
        %v519 = vpack.c.bf16 %v511, %v510
        %v520 = vld [vmem:[%s3] sm:$0xf]
        %v521 = vld [vmem:[%s3 + $0x4] sm:$0xf]
        %v522 = vld [vmem:[%s3 + $0x8] sm:$0xf]
        %v523 = vld [vmem:[%s3 + $0xc] sm:$0xf]
        %v524 = vld [vmem:[%s3 + $0x10] sm:$0xf]
        %v525 = vld [vmem:[%s3 + $0x14] sm:$0xf]
        %v526 = vld [vmem:[%s3 + $0x18] sm:$0xf]
        %v527 = vld [vmem:[%s3 + $0x1c] sm:$0xf]
        %v528 = vld [vmem:[%s3 + $0x20] sm:$0xf]
        %v529 = vld [vmem:[%s3 + $0x24] sm:$0xf]
        %v530 = vld [vmem:[%s3 + $0x28] sm:$0xf]
        %v531 = vld [vmem:[%s3 + $0x2c] sm:$0xf]
        %v532 = vld [vmem:[%s3 + $0x30] sm:$0xf]
        %v533 = vld [vmem:[%s3 + $0x34] sm:$0xf]
        %v534 = vld [vmem:[%s3 + $0x38] sm:$0xf]
        %v535 = vld [vmem:[%s3 + $0x3c] sm:$0xf]
        %v536 = vld [vmem:[%s4] sm:$0x1]
        %v538 = vlaneseq
        %v539 = vshrl.u32 %v538, 7
        %v540 = vsub.s32 0, %v539
        %v541 = vrot.slane %v536, %v540
        %v559 = vunpack.c.l.b16 %v520
        %v560 = vunpack.c.l.b16 %v521
        %v561 = vunpack.c.l.b16 %v522
        %v562 = vunpack.c.l.b16 %v523
        %v563 = vunpack.c.l.b16 %v524
        %v564 = vunpack.c.l.b16 %v525
        %v565 = vunpack.c.l.b16 %v526
        %v566 = vunpack.c.l.b16 %v527
        %v567 = vunpack.c.l.b16 %v528
        %v568 = vunpack.c.l.b16 %v529
        %v569 = vunpack.c.l.b16 %v530
        %v570 = vunpack.c.l.b16 %v531
        %v571 = vunpack.c.l.b16 %v532
        %v572 = vunpack.c.l.b16 %v533
        %v573 = vunpack.c.l.b16 %v534
        %v574 = vunpack.c.l.b16 %v535
        %v575 = vpack.c.b16 %v560, %v559
        %v576 = vpack.c.b16 %v562, %v561
        %v577 = vpack.c.b16 %v564, %v563
        %v578 = vpack.c.b16 %v566, %v565
        %v579 = vpack.c.b16 %v568, %v567
        %v580 = vpack.c.b16 %v570, %v569
        %v581 = vpack.c.b16 %v572, %v571
        %v582 = vpack.c.b16 %v574, %v573
        %591 = vmatprep.subr.bf16.mxu0 0
        %592 = vmatpush1.bf16.msra.mxu0 %v575
        %593 = vmatprep.subr.bf16.mxu0 0
        %594 = vmatpush1.bf16.msra.mxu0 %v576
        %595 = vmatprep.subr.bf16.mxu0 0
        %596 = vmatpush1.bf16.msra.mxu0 %v577
        %597 = vmatprep.subr.bf16.mxu0 0
        %598 = vmatpush1.bf16.msra.mxu0 %v578
        %599 = vmatprep.subr.bf16.mxu0 0
        %600 = vmatpush1.bf16.msra.mxu0 %v579
        %601 = vmatprep.subr.bf16.mxu0 0
        %602 = vmatpush1.bf16.msra.mxu0 %v580
        %603 = vmatprep.subr.bf16.mxu0 0
        %604 = vmatpush1.bf16.msra.mxu0 %v581
        %605 = vmatprep.subr.bf16.mxu0 0
        %606 = vmatpush1.bf16.msra.mxu0 %v582
        %607 = vmatprep.subr.bf16.mxu0 0
        %608 = vmatpush1.bf16.msra.mxu0 0
        %609 = vmatprep.subr.bf16.mxu0 0
        %610 = vmatpush1.bf16.msra.mxu0 0
        %611 = vmatprep.subr.bf16.mxu0 0
        %612 = vmatpush1.bf16.msra.mxu0 0
        %613 = vmatprep.subr.bf16.mxu0 0
        %614 = vmatpush1.bf16.msra.mxu0 0
        %615 = vmatprep.subr.bf16.mxu0 0
        %616 = vmatpush1.bf16.msra.mxu0 0
        %617 = vmatprep.subr.bf16.mxu0 0
        %618 = vmatpush1.bf16.msra.mxu0 0
        %619 = vmatprep.subr.bf16.mxu0 0
        %620 = vmatpush1.bf16.msra.mxu0 0
        %621 = vmatprep.subr.bf16.mxu0 0
        %622 = vmatpush1.bf16.msra.mxu0 0
        %623 = vmatprep.mubr.bf16.mxu0 0
        %624 = vmatmul.mubr.bf16.gmra.mrb[0].mxu0 %v512
        %v625 = vpop.f32.mrb[0].mxu0
        %v626 = vadd.f32 %v541, %v625
        %v627 = vpop.f32.mrb[0].mxu0
        %v628 = vpop.f32.mrb[0].mxu0
        %v629 = vadd.f32 %v541, %v628
        %v630 = vpop.f32.mrb[0].mxu0
        %631 = vmatprep.mubr.bf16.mxu0 0
        %632 = vmatmul.mubr.bf16.gmra.mrb[0].mxu0 %v513
        %v633 = vpop.f32.mrb[0].mxu0
        %v634 = vadd.f32 %v541, %v633
        %v635 = vpop.f32.mrb[0].mxu0
        %v636 = vpop.f32.mrb[0].mxu0
        %v637 = vadd.f32 %v541, %v636
        %v638 = vpop.f32.mrb[0].mxu0
        %639 = vmatprep.mubr.bf16.mxu0 0
        %640 = vmatmul.mubr.bf16.gmra.mrb[0].mxu0 %v514
        %v641 = vpop.f32.mrb[0].mxu0
        %v642 = vadd.f32 %v541, %v641
        %v643 = vpop.f32.mrb[0].mxu0
        %v644 = vpop.f32.mrb[0].mxu0
        %v645 = vadd.f32 %v541, %v644
        %v646 = vpop.f32.mrb[0].mxu0
        %647 = vmatprep.mubr.bf16.mxu0 0
        %648 = vmatmul.mubr.bf16.gmra.mrb[0].mxu0 %v515
        %v649 = vpop.f32.mrb[0].mxu0
        %v650 = vadd.f32 %v541, %v649
        %v651 = vpop.f32.mrb[0].mxu0
        %v652 = vpop.f32.mrb[0].mxu0
        %v653 = vadd.f32 %v541, %v652
        %v654 = vpop.f32.mrb[0].mxu0
        %655 = vmatprep.mubr.bf16.mxu0 0
        %656 = vmatmul.mubr.bf16.gmra.mrb[0].mxu0 %v516
        %v657 = vpop.f32.mrb[0].mxu0
        %v658 = vadd.f32 %v541, %v657
        %v659 = vpop.f32.mrb[0].mxu0
        %v660 = vpop.f32.mrb[0].mxu0
        %v661 = vadd.f32 %v541, %v660
        %v662 = vpop.f32.mrb[0].mxu0
        %663 = vmatprep.mubr.bf16.mxu0 0
        %664 = vmatmul.mubr.bf16.gmra.mrb[0].mxu0 %v517
        %v665 = vpop.f32.mrb[0].mxu0
        %v666 = vadd.f32 %v541, %v665
        %v667 = vpop.f32.mrb[0].mxu0
        %v668 = vpop.f32.mrb[0].mxu0
        %v669 = vadd.f32 %v541, %v668
        %v670 = vpop.f32.mrb[0].mxu0
        %671 = vmatprep.mubr.bf16.mxu0 0
        %672 = vmatmul.mubr.bf16.gmra.mrb[0].mxu0 %v518
        %v673 = vpop.f32.mrb[0].mxu0
        %v674 = vadd.f32 %v541, %v673
        %v675 = vpop.f32.mrb[0].mxu0
        %v676 = vpop.f32.mrb[0].mxu0
        %v677 = vadd.f32 %v541, %v676
        %v678 = vpop.f32.mrb[0].mxu0
        %679 = vmatprep.mubr.bf16.mxu0 0
        %680 = vmatmul.mubr.bf16.gmra.mrb[0].mxu0 %v519
        %v681 = vpop.f32.mrb[0].mxu0
        %v682 = vadd.f32 %v541, %v681
        %v683 = vpop.f32.mrb[0].mxu0
        %v684 = vpop.f32.mrb[0].mxu0
        %v685 = vadd.f32 %v541, %v684
        %v686 = vpop.f32.mrb[0].mxu0
        %687 = vdwg.mxu0
        %v688 = vmax.f32 %v626, 0.0
        %v689 = vmax.f32 %v629, 0.0
        %v690 = vmax.f32 %v634, 0.0
        %v691 = vmax.f32 %v637, 0.0
        %v692 = vmax.f32 %v642, 0.0
        %v693 = vmax.f32 %v645, 0.0
        %v694 = vmax.f32 %v650, 0.0
        %v695 = vmax.f32 %v653, 0.0
        %v696 = vmax.f32 %v658, 0.0
        %v697 = vmax.f32 %v661, 0.0
        %v698 = vmax.f32 %v666, 0.0
        %v699 = vmax.f32 %v669, 0.0
        %v700 = vmax.f32 %v674, 0.0
        %v701 = vmax.f32 %v677, 0.0
        %v702 = vmax.f32 %v682, 0.0
        %v703 = vmax.f32 %v685, 0.0
        %v704 = vpack.c.bf16 %v689, %v688
        %v705 = vpack.c.bf16 %v691, %v690
        %v706 = vpack.c.bf16 %v693, %v692
        %v707 = vpack.c.bf16 %v695, %v694
        %v708 = vpack.c.bf16 %v697, %v696
        %v709 = vpack.c.bf16 %v699, %v698
        %v710 = vpack.c.bf16 %v701, %v700
        %v711 = vpack.c.bf16 %v703, %v702
        %v712 = vld [vmem:[%s5] sm:$0xf]
        %v713 = vld [vmem:[%s5 + $0x4] sm:$0xf]
        %v714 = vld [vmem:[%s5 + $0x8] sm:$0xf]
        %v715 = vld [vmem:[%s5 + $0xc] sm:$0xf]
        %v716 = vld [vmem:[%s5 + $0x10] sm:$0xf]
        %v717 = vld [vmem:[%s5 + $0x14] sm:$0xf]
        %v718 = vld [vmem:[%s5 + $0x18] sm:$0xf]
        %v719 = vld [vmem:[%s5 + $0x1c] sm:$0xf]
        %v720 = vld [vmem:[%s5 + $0x20] sm:$0xf]
        %v721 = vld [vmem:[%s5 + $0x24] sm:$0xf]
        %v722 = vld [vmem:[%s5 + $0x28] sm:$0xf]
        %v723 = vld [vmem:[%s5 + $0x2c] sm:$0xf]
        %v724 = vld [vmem:[%s5 + $0x30] sm:$0xf]
        %v725 = vld [vmem:[%s5 + $0x34] sm:$0xf]
        %v726 = vld [vmem:[%s5 + $0x38] sm:$0xf]
        %v727 = vld [vmem:[%s5 + $0x3c] sm:$0xf]
        %v728 = vld [vmem:[%s6] sm:$0x1]
        %v730 = vlaneseq
        %v731 = vshrl.u32 %v730, 7
        %v732 = vsub.s32 0, %v731
        %v733 = vrot.slane %v728, %v732
        %v751 = vunpack.c.l.b16 %v712
        %v752 = vunpack.c.l.b16 %v713
        %v753 = vunpack.c.l.b16 %v714
        %v754 = vunpack.c.l.b16 %v715
        %v755 = vunpack.c.l.b16 %v716
        %v756 = vunpack.c.l.b16 %v717
        %v757 = vunpack.c.l.b16 %v718
        %v758 = vunpack.c.l.b16 %v719
        %v759 = vunpack.c.l.b16 %v720
        %v760 = vunpack.c.l.b16 %v721
        %v761 = vunpack.c.l.b16 %v722
        %v762 = vunpack.c.l.b16 %v723
        %v763 = vunpack.c.l.b16 %v724
        %v764 = vunpack.c.l.b16 %v725
        %v765 = vunpack.c.l.b16 %v726
        %v766 = vunpack.c.l.b16 %v727
        %v767 = vpack.c.b16 %v752, %v751
        %v768 = vpack.c.b16 %v754, %v753
        %v769 = vpack.c.b16 %v756, %v755
        %v770 = vpack.c.b16 %v758, %v757
        %v771 = vpack.c.b16 %v760, %v759
        %v772 = vpack.c.b16 %v762, %v761
        %v773 = vpack.c.b16 %v764, %v763
        %v774 = vpack.c.b16 %v766, %v765
        %783 = vmatprep.subr.bf16.mxu0 0
        %784 = vmatpush1.bf16.msra.mxu0 %v767
        %785 = vmatprep.subr.bf16.mxu0 0
        %786 = vmatpush1.bf16.msra.mxu0 %v768
        %787 = vmatprep.subr.bf16.mxu0 0
        %788 = vmatpush1.bf16.msra.mxu0 %v769
        %789 = vmatprep.subr.bf16.mxu0 0
        %790 = vmatpush1.bf16.msra.mxu0 %v770
        %791 = vmatprep.subr.bf16.mxu0 0
        %792 = vmatpush1.bf16.msra.mxu0 %v771
        %793 = vmatprep.subr.bf16.mxu0 0
        %794 = vmatpush1.bf16.msra.mxu0 %v772
        %795 = vmatprep.subr.bf16.mxu0 0
        %796 = vmatpush1.bf16.msra.mxu0 %v773
        %797 = vmatprep.subr.bf16.mxu0 0
        %798 = vmatpush1.bf16.msra.mxu0 %v774
        %799 = vmatprep.subr.bf16.mxu0 0
        %800 = vmatpush1.bf16.msra.mxu0 0
        %801 = vmatprep.subr.bf16.mxu0 0
        %802 = vmatpush1.bf16.msra.mxu0 0
        %803 = vmatprep.subr.bf16.mxu0 0
        %804 = vmatpush1.bf16.msra.mxu0 0
        %805 = vmatprep.subr.bf16.mxu0 0
        %806 = vmatpush1.bf16.msra.mxu0 0
        %807 = vmatprep.subr.bf16.mxu0 0
        %808 = vmatpush1.bf16.msra.mxu0 0
        %809 = vmatprep.subr.bf16.mxu0 0
        %810 = vmatpush1.bf16.msra.mxu0 0
        %811 = vmatprep.subr.bf16.mxu0 0
        %812 = vmatpush1.bf16.msra.mxu0 0
        %813 = vmatprep.subr.bf16.mxu0 0
        %814 = vmatpush1.bf16.msra.mxu0 0
        %815 = vmatprep.mubr.bf16.mxu0 0
        %816 = vmatmul.mubr.bf16.gmra.mrb[0].mxu0 %v704
        %v817 = vpop.f32.mrb[0].mxu0
        %v818 = vadd.f32 %v733, %v817
        %v819 = vpop.f32.mrb[0].mxu0
        %v820 = vpop.f32.mrb[0].mxu0
        %v821 = vadd.f32 %v733, %v820
        %v822 = vpop.f32.mrb[0].mxu0
        %823 = vmatprep.mubr.bf16.mxu0 0
        %824 = vmatmul.mubr.bf16.gmra.mrb[0].mxu0 %v705
        %v825 = vpop.f32.mrb[0].mxu0
        %v826 = vadd.f32 %v733, %v825
        %v827 = vpop.f32.mrb[0].mxu0
        %v828 = vpop.f32.mrb[0].mxu0
        %v829 = vadd.f32 %v733, %v828
        %v830 = vpop.f32.mrb[0].mxu0
        %831 = vmatprep.mubr.bf16.mxu0 0
        %832 = vmatmul.mubr.bf16.gmra.mrb[0].mxu0 %v706
        %v833 = vpop.f32.mrb[0].mxu0
        %v834 = vadd.f32 %v733, %v833
        %v835 = vpop.f32.mrb[0].mxu0
        %v836 = vpop.f32.mrb[0].mxu0
        %v837 = vadd.f32 %v733, %v836
        %v838 = vpop.f32.mrb[0].mxu0
        %839 = vmatprep.mubr.bf16.mxu0 0
        %840 = vmatmul.mubr.bf16.gmra.mrb[0].mxu0 %v707
        %v841 = vpop.f32.mrb[0].mxu0
        %v842 = vadd.f32 %v733, %v841
        %v843 = vpop.f32.mrb[0].mxu0
        %v844 = vpop.f32.mrb[0].mxu0
        %v845 = vadd.f32 %v733, %v844
        %v846 = vpop.f32.mrb[0].mxu0
        %847 = vmatprep.mubr.bf16.mxu0 0
        %848 = vmatmul.mubr.bf16.gmra.mrb[0].mxu0 %v708
        %v849 = vpop.f32.mrb[0].mxu0
        %v850 = vadd.f32 %v733, %v849
        %v851 = vpop.f32.mrb[0].mxu0
        %v852 = vpop.f32.mrb[0].mxu0
        %v853 = vadd.f32 %v733, %v852
        %v854 = vpop.f32.mrb[0].mxu0
        %855 = vmatprep.mubr.bf16.mxu0 0
        %856 = vmatmul.mubr.bf16.gmra.mrb[0].mxu0 %v709
        %v857 = vpop.f32.mrb[0].mxu0
        %v858 = vadd.f32 %v733, %v857
        %v859 = vpop.f32.mrb[0].mxu0
        %v860 = vpop.f32.mrb[0].mxu0
        %v861 = vadd.f32 %v733, %v860
        %v862 = vpop.f32.mrb[0].mxu0
        %863 = vmatprep.mubr.bf16.mxu0 0
        %864 = vmatmul.mubr.bf16.gmra.mrb[0].mxu0 %v710
        %v865 = vpop.f32.mrb[0].mxu0
        %v866 = vadd.f32 %v733, %v865
        %v867 = vpop.f32.mrb[0].mxu0
        %v868 = vpop.f32.mrb[0].mxu0
        %v869 = vadd.f32 %v733, %v868
        %v870 = vpop.f32.mrb[0].mxu0
        %871 = vmatprep.mubr.bf16.mxu0 0
        %872 = vmatmul.mubr.bf16.gmra.mrb[0].mxu0 %v711
        %v873 = vpop.f32.mrb[0].mxu0
        %v874 = vadd.f32 %v733, %v873
        %v875 = vpop.f32.mrb[0].mxu0
        %v876 = vpop.f32.mrb[0].mxu0
        %v877 = vadd.f32 %v733, %v876
        %v878 = vpop.f32.mrb[0].mxu0
        %879 = vdwg.mxu0
        %v880 = vmax.f32 %v818, 0.0
        %v881 = vmax.f32 %v821, 0.0
        %v882 = vmax.f32 %v826, 0.0
        %v883 = vmax.f32 %v829, 0.0
        %v884 = vmax.f32 %v834, 0.0
        %v885 = vmax.f32 %v837, 0.0
        %v886 = vmax.f32 %v842, 0.0
        %v887 = vmax.f32 %v845, 0.0
        %v888 = vmax.f32 %v850, 0.0
        %v889 = vmax.f32 %v853, 0.0
        %v890 = vmax.f32 %v858, 0.0
        %v891 = vmax.f32 %v861, 0.0
        %v892 = vmax.f32 %v866, 0.0
        %v893 = vmax.f32 %v869, 0.0
        %v894 = vmax.f32 %v874, 0.0
        %v895 = vmax.f32 %v877, 0.0
        %v896 = vpack.c.bf16 %v881, %v880
        %v897 = vpack.c.bf16 %v883, %v882
        %v898 = vpack.c.bf16 %v885, %v884
        %v899 = vpack.c.bf16 %v887, %v886
        %v900 = vpack.c.bf16 %v889, %v888
        %v901 = vpack.c.bf16 %v891, %v890
        %v902 = vpack.c.bf16 %v893, %v892
        %v903 = vpack.c.bf16 %v895, %v894
        %v904 = vld [vmem:[%s7] sm:$0xf]
        %v905 = vld [vmem:[%s7 + $0x4] sm:$0xf]
        %v906 = vld [vmem:[%s7 + $0x8] sm:$0xf]
        %v907 = vld [vmem:[%s7 + $0xc] sm:$0xf]
        %v908 = vld [vmem:[%s7 + $0x10] sm:$0xf]
        %v909 = vld [vmem:[%s7 + $0x14] sm:$0xf]
        %v910 = vld [vmem:[%s7 + $0x18] sm:$0xf]
        %v911 = vld [vmem:[%s7 + $0x1c] sm:$0xf]
        %v912 = vld [vmem:[%s7 + $0x20] sm:$0xf]
        %v913 = vld [vmem:[%s7 + $0x24] sm:$0xf]
        %v914 = vld [vmem:[%s7 + $0x28] sm:$0xf]
        %v915 = vld [vmem:[%s7 + $0x2c] sm:$0xf]
        %v916 = vld [vmem:[%s7 + $0x30] sm:$0xf]
        %v917 = vld [vmem:[%s7 + $0x34] sm:$0xf]
        %v918 = vld [vmem:[%s7 + $0x38] sm:$0xf]
        %v919 = vld [vmem:[%s7 + $0x3c] sm:$0xf]
        %v920 = vld [vmem:[%s8] sm:$0x1]
        %v922 = vlaneseq
        %v923 = vshrl.u32 %v922, 7
        %v924 = vsub.s32 0, %v923
        %v925 = vrot.slane %v920, %v924
        %v943 = vunpack.c.l.b16 %v904
        %v944 = vunpack.c.l.b16 %v905
        %v945 = vunpack.c.l.b16 %v906
        %v946 = vunpack.c.l.b16 %v907
        %v947 = vunpack.c.l.b16 %v908
        %v948 = vunpack.c.l.b16 %v909
        %v949 = vunpack.c.l.b16 %v910
        %v950 = vunpack.c.l.b16 %v911
        %v951 = vunpack.c.l.b16 %v912
        %v952 = vunpack.c.l.b16 %v913
        %v953 = vunpack.c.l.b16 %v914
        %v954 = vunpack.c.l.b16 %v915
        %v955 = vunpack.c.l.b16 %v916
        %v956 = vunpack.c.l.b16 %v917
        %v957 = vunpack.c.l.b16 %v918
        %v958 = vunpack.c.l.b16 %v919
        %v959 = vpack.c.b16 %v944, %v943
        %v960 = vpack.c.b16 %v946, %v945
        %v961 = vpack.c.b16 %v948, %v947
        %v962 = vpack.c.b16 %v950, %v949
        %v963 = vpack.c.b16 %v952, %v951
        %v964 = vpack.c.b16 %v954, %v953
        %v965 = vpack.c.b16 %v956, %v955
        %v966 = vpack.c.b16 %v958, %v957
        %975 = vmatprep.subr.bf16.mxu0 0
        %976 = vmatpush1.bf16.msra.mxu0 %v959
        %977 = vmatprep.subr.bf16.mxu0 0
        %978 = vmatpush1.bf16.msra.mxu0 %v960
        %979 = vmatprep.subr.bf16.mxu0 0
        %980 = vmatpush1.bf16.msra.mxu0 %v961
        %981 = vmatprep.subr.bf16.mxu0 0
        %982 = vmatpush1.bf16.msra.mxu0 %v962
        %983 = vmatprep.subr.bf16.mxu0 0
        %984 = vmatpush1.bf16.msra.mxu0 %v963
        %985 = vmatprep.subr.bf16.mxu0 0
        %986 = vmatpush1.bf16.msra.mxu0 %v964
        %987 = vmatprep.subr.bf16.mxu0 0
        %988 = vmatpush1.bf16.msra.mxu0 %v965
        %989 = vmatprep.subr.bf16.mxu0 0
        %990 = vmatpush1.bf16.msra.mxu0 %v966
        %991 = vmatprep.subr.bf16.mxu0 0
        %992 = vmatpush1.bf16.msra.mxu0 0
        %993 = vmatprep.subr.bf16.mxu0 0
        %994 = vmatpush1.bf16.msra.mxu0 0
        %995 = vmatprep.subr.bf16.mxu0 0
        %996 = vmatpush1.bf16.msra.mxu0 0
        %997 = vmatprep.subr.bf16.mxu0 0
        %998 = vmatpush1.bf16.msra.mxu0 0
        %999 = vmatprep.subr.bf16.mxu0 0
        %1000 = vmatpush1.bf16.msra.mxu0 0
        %1001 = vmatprep.subr.bf16.mxu0 0
        %1002 = vmatpush1.bf16.msra.mxu0 0
        %1003 = vmatprep.subr.bf16.mxu0 0
        %1004 = vmatpush1.bf16.msra.mxu0 0
        %1005 = vmatprep.subr.bf16.mxu0 0
        %1006 = vmatpush1.bf16.msra.mxu0 0
        %1007 = vmatprep.mubr.bf16.mxu0 0
        %1008 = vmatmul.mubr.bf16.gmra.mrb[0].mxu0 %v896
        %v1009 = vpop.f32.mrb[0].mxu0
        %v1010 = vadd.f32 %v925, %v1009
        %v1011 = vpop.f32.mrb[0].mxu0
        %v1012 = vpop.f32.mrb[0].mxu0
        %v1013 = vadd.f32 %v925, %v1012
        %v1014 = vpop.f32.mrb[0].mxu0
        %1015 = vmatprep.mubr.bf16.mxu0 0
        %1016 = vmatmul.mubr.bf16.gmra.mrb[0].mxu0 %v897
        %v1017 = vpop.f32.mrb[0].mxu0
        %v1018 = vadd.f32 %v925, %v1017
        %v1019 = vpop.f32.mrb[0].mxu0
        %v1020 = vpop.f32.mrb[0].mxu0
        %v1021 = vadd.f32 %v925, %v1020
        %v1022 = vpop.f32.mrb[0].mxu0
        %1023 = vmatprep.mubr.bf16.mxu0 0
        %1024 = vmatmul.mubr.bf16.gmra.mrb[0].mxu0 %v898
        %v1025 = vpop.f32.mrb[0].mxu0
        %v1026 = vadd.f32 %v925, %v1025
        %v1027 = vpop.f32.mrb[0].mxu0
        %v1028 = vpop.f32.mrb[0].mxu0
        %v1029 = vadd.f32 %v925, %v1028
        %v1030 = vpop.f32.mrb[0].mxu0
        %1031 = vmatprep.mubr.bf16.mxu0 0
        %1032 = vmatmul.mubr.bf16.gmra.mrb[0].mxu0 %v899
        %v1033 = vpop.f32.mrb[0].mxu0
        %v1034 = vadd.f32 %v925, %v1033
        %v1035 = vpop.f32.mrb[0].mxu0
        %v1036 = vpop.f32.mrb[0].mxu0
        %v1037 = vadd.f32 %v925, %v1036
        %v1038 = vpop.f32.mrb[0].mxu0
        %1039 = vmatprep.mubr.bf16.mxu0 0
        %1040 = vmatmul.mubr.bf16.gmra.mrb[0].mxu0 %v900
        %v1041 = vpop.f32.mrb[0].mxu0
        %v1042 = vadd.f32 %v925, %v1041
        %v1043 = vpop.f32.mrb[0].mxu0
        %v1044 = vpop.f32.mrb[0].mxu0
        %v1045 = vadd.f32 %v925, %v1044
        %v1046 = vpop.f32.mrb[0].mxu0
        %1047 = vmatprep.mubr.bf16.mxu0 0
        %1048 = vmatmul.mubr.bf16.gmra.mrb[0].mxu0 %v901
        %v1049 = vpop.f32.mrb[0].mxu0
        %v1050 = vadd.f32 %v925, %v1049
        %v1051 = vpop.f32.mrb[0].mxu0
        %v1052 = vpop.f32.mrb[0].mxu0
        %v1053 = vadd.f32 %v925, %v1052
        %v1054 = vpop.f32.mrb[0].mxu0
        %1055 = vmatprep.mubr.bf16.mxu0 0
        %1056 = vmatmul.mubr.bf16.gmra.mrb[0].mxu0 %v902
        %v1057 = vpop.f32.mrb[0].mxu0
        %v1058 = vadd.f32 %v925, %v1057
        %v1059 = vpop.f32.mrb[0].mxu0
        %v1060 = vpop.f32.mrb[0].mxu0
        %v1061 = vadd.f32 %v925, %v1060
        %v1062 = vpop.f32.mrb[0].mxu0
        %1063 = vmatprep.mubr.bf16.mxu0 0
        %1064 = vmatmul.mubr.bf16.gmra.mrb[0].mxu0 %v903
        %v1065 = vpop.f32.mrb[0].mxu0
        %v1066 = vadd.f32 %v925, %v1065
        %v1067 = vpop.f32.mrb[0].mxu0
        %v1068 = vpop.f32.mrb[0].mxu0
        %v1069 = vadd.f32 %v925, %v1068
        %v1070 = vpop.f32.mrb[0].mxu0
        %1071 = vdwg.mxu0
        %1072 = vst [vmem:[%s326] sm:$0xff] %v1010
        %1073 = vst [vmem:[%s326 + $0x8] sm:$0xff] %v1013
        %1074 = vst [vmem:[%s326 + $0x10] sm:$0xff] %v1018
        %1075 = vst [vmem:[%s326 + $0x18] sm:$0xff] %v1021
        %1076 = vst [vmem:[%s326 + $0x20] sm:$0xff] %v1026
        %1077 = vst [vmem:[%s326 + $0x28] sm:$0xff] %v1029
        %1078 = vst [vmem:[%s326 + $0x30] sm:$0xff] %v1034
        %1079 = vst [vmem:[%s326 + $0x38] sm:$0xff] %v1037
        %1080 = vst [vmem:[%s326 + $0x40] sm:$0xff] %v1042
        %1081 = vst [vmem:[%s326 + $0x48] sm:$0xff] %v1045
        %1082 = vst [vmem:[%s326 + $0x50] sm:$0xff] %v1050
        %1083 = vst [vmem:[%s326 + $0x58] sm:$0xff] %v1053
        %1084 = vst [vmem:[%s326 + $0x60] sm:$0xff] %v1058
        %1085 = vst [vmem:[%s326 + $0x68] sm:$0xff] %v1061
        %1086 = vst [vmem:[%s326 + $0x70] sm:$0xff] %v1066
        %1087 = vst [vmem:[%s326 + $0x78] sm:$0xff] %v1069
        %s1088 = sand.u32 %s225, 1
        %s1089 = scalar_lea.sflag [#allocation3], %s1088
        %s1090 = sand.u32 %s225, 1
        %s1091 = smul.addr %s1090, 128
        %s1092 = scalar_lea.vmem [#allocation2], %s1091
        // Predicated region
        $region57: #{tpu_custom_call.1} parent=55 // pred_check
          %p1093 = pneg %p235
        $region58: #{tpu_custom_call.1} parent=55 // pred_check_branch
          %1095 = sbr.rel (%p1093) target = $region60
        $region59: #{tpu_custom_call.1} parent=55 // pred_region
          %s1096 = smul.u32 16, %s23
          %s1098 = ssub.s32 2048, 2048
          %1099 = vsyncadd %s1089, %s1098
          %s1100 = smul.addr %s1096, 128
          %s1101 = scalar_lea.hbm %s9, %s1100
          %s1102 = sshll.u32 %s1092, 4
          %s1103 = int_to_ptr.vmem [resolvable:$true] %s1102
          %1108 = dma.vmem_to_hbm [thread:$0]  %s1103, 2048, %s1101, %s1089, 128, 128, 8
        $region60: #{tpu_custom_call.1} parent=55 // pred_fallthru
          _
      $region56: #{tpu_custom_call.1} parent=5 // pred_fallthru
        _
      %p1109 = scmp.le.s32.totalorder 2, %s18
      // Predicated region
      $region61: #{tpu_custom_call.1} parent=5 // pred_check
        %p1110 = pneg %p1109
      $region62: #{tpu_custom_call.1} parent=5 // pred_check_branch
        %1112 = sbr.rel (%p1110) target = $region64
      $region63: #{tpu_custom_call.1} parent=5 // pred_region
        %s1113 = ssub.s32 %s18, 2
        // Predicated region
        $region65: #{tpu_custom_call.1} parent=63 // pred_check
          %p1114 = pneg %p241
        $region66: #{tpu_custom_call.1} parent=63 // pred_check_branch
          %1116 = sbr.rel (%p1114) target = $region68
        $region67: #{tpu_custom_call.1} parent=63 // pred_region
          %s1117 = sand.u32 %s226, 1
          %s1118 = scalar_lea.sflag [#allocation3], %s1117
          %s1119 = sand.u32 %s226, 1
          %s1120 = smul.addr %s1119, 128
          %s1121 = scalar_lea.vmem [#allocation2], %s1120
          %1122 = dma.done %s1118, 2048
        $region68: #{tpu_custom_call.1} parent=63 // pred_fallthru
          _
      $region64: #{tpu_custom_call.1} parent=5 // pred_fallthru
        _
    $region6: #{tpu_custom_call.1} parent=1 // loop_footer
      %s22 = sadd.s32 1, %s18
    $region7: #{tpu_custom_call.1} parent=1 // loop_footer_branch
      %17 = sbr.rel target = $region3
    $region8: #{tpu_custom_call.1} parent=1 // loop_exit
      _
    %1123 = vsyncpa [#allocation3], 1
    %s1124 = scalar_lea.sflag [#allocation3], 1
    %1125 = vsyncpa %s1124, 1

</llo_original>
